<compile_context>
chip_gen: v6e
topology: v6e:2x2x1
jax: 0.10.0
libtpu: 0.0.40
codegen_flags: <defaults>
</compile_context>

<pallas_src>
import jax
import jax.numpy as jnp
from jax import lax
from jax.experimental import pallas as pl
from jax.experimental.pallas import tpu as pltpu

EPS = 1e-5
KH = KW = 3


def _round_up(x, m):
    return (x + m - 1) // m * m


def _pick_row_tile(n, h, wp):
    """Image rows per grid step.  Wants (th*wp) % 8 == 0 (sublane-aligned wide
    tile) and >=8 total grid steps (>=4 per v7x TensorCore) while keeping the
    wide tile modest."""
    divs = [d for d in range(1, h + 1)
            if h % d == 0 and ((d * wp) % 8 == 0 or d == h)]
    for d in sorted(divs, reverse=True):
        if n * (h // d) >= 8 and d * wp <= 4096:
            return d
    return min(divs)   # fall back to the most grid steps available


def conv_block(x_nchw, weight_oihw, bias, gamma, beta):
    """x_nchw: (N, Cin, H, W) float32.  Returns (N, Cout, H, W) float32."""
    N, Cin, H, W = x_nchw.shape
    Cout = weight_oihw.shape[0]
    HP, WP = H + 2, W + 2
    C8 = _round_up(Cout, 8)              # sublane-group channel pad only
    TH = _pick_row_tile(N, H, WP)        # image rows per tile
    R = H // TH                          # row tiles per image
    T = N * R                            # total grid steps
    TMW = TH * WP                        # "wide" rows per tile (2 garbage cols/row)
    RI = _round_up(HP * WP + 2, 8)       # flat input rows per image (+2 halo rows
                                         #  so the garbage columns' taps stay in-bounds)

    # ---- layout-only prep (no im2col): NCHW -> flat padded NHWC rows ----
    x_nhwc = jnp.transpose(x_nchw, (0, 2, 3, 1)).astype(jnp.float32)
    x_pad = jnp.pad(x_nhwc, ((0, 0), (1, 1), (1, 1), (0, 0)))
    x_flat = jnp.pad(x_pad.reshape(N, HP * WP, Cin),
                     ((0, 0), (0, RI - HP * WP), (0, 0)))

    # weights OIHW -> (9, Cin, C8); bias / gamma / beta -> (1, C8)
    w_taps = jnp.transpose(weight_oihw, (2, 3, 1, 0)).reshape(KH * KW, Cin, Cout)
    w_taps = jnp.pad(w_taps.astype(jnp.float32),
                     ((0, 0), (0, 0), (0, C8 - Cout)))
    b_p = jnp.pad(bias.reshape(1, Cout).astype(jnp.float32),
                  ((0, 0), (0, C8 - Cout)))
    g_p = jnp.pad(gamma.reshape(1, Cout).astype(jnp.float32),
                  ((0, 0), (0, C8 - Cout)))
    be_p = jnp.pad(beta.reshape(1, Cout).astype(jnp.float32),
                   ((0, 0), (0, C8 - Cout)))

    # 0/1 mask of the valid (non-garbage) wide columns; same for every tile.
    col = jnp.arange(TMW, dtype=jnp.int32) % WP
    valid_mask = (col < W).astype(jnp.float32).reshape(TMW, 1)
    cnt_tile = TH * W                    # valid output positions per tile

    # ---- shared in-kernel helper: conv + bias over one wide row tile ----
    def conv_tile(x_ref, w_ref, b_ref):
        base = pl.program_id(1) * TMW
        acc = jnp.zeros((TMW, C8), jnp.float32)
        for t in range(KH * KW):
            dy, dx = divmod(t, KW)
            xs = x_ref[0, pl.ds(base + dy * WP + dx, TMW), :]   # (TMW, Cin)
            acc = acc + jnp.dot(xs, w_ref[t],
                                preferred_element_type=jnp.float32)
        return acc + b_ref[...]

    # ---- pass 1: conv (never written) + per-tile BN partial statistics ----
    def stats_kernel(x_ref, w_ref, b_ref, mask_ref, sum_ref, ssd_ref):
        acc = conv_tile(x_ref, w_ref, b_ref)
        m = mask_ref[...]                                        # (TMW, 1)
        s = jnp.sum(acc * m, axis=0, keepdims=True)              # (1, C8)
        mu = s * (1.0 / cnt_tile)                                # per-tile mean
        d = (acc - mu) * m
        sum_ref[0] = s
        ssd_ref[0] = jnp.sum(d * d, axis=0, keepdims=True)       # SS about tile mean

    # ---- pass 2: conv recompute + fused bias + BN affine + ReLU ----
    def conv_bn_relu_kernel(x_ref, w_ref, b_ref, scale_ref, shift_ref, out_ref):
        acc = conv_tile(x_ref, w_ref, b_ref)
        out_ref[0] = jnp.maximum(acc * scale_ref[...] + shift_ref[...],
                                 0.0).astype(out_ref.dtype)

    x_spec = pl.BlockSpec((1, RI, Cin), lambda n, r: (n, 0, 0))    # per-image slab
    w_spec = pl.BlockSpec((KH * KW, Cin, C8), lambda n, r: (0, 0, 0))
    c_spec = pl.BlockSpec((1, C8), lambda n, r: (0, 0))
    m_spec = pl.BlockSpec((TMW, 1), lambda n, r: (0, 0))

    # explicit VMEM budget (double-buffered blocks), capped for v7x's 64 MiB
    per_step_bytes = 4 * (2 * (RI * Cin + TMW * C8)
                          + KH * KW * Cin * C8 + 8 * C8 + 2 * TMW)
    vmem_budget = int(min(48 * 2 ** 20, max(16 * 2 ** 20, 8 * per_step_bytes)))
    cparams = pltpu.CompilerParams(
        dimension_semantics=("parallel", "parallel"),
        vmem_limit_bytes=vmem_budget)

    psum, pssd = pl.pallas_call(
        stats_kernel,
        out_shape=(jax.ShapeDtypeStruct((T, 1, C8), jnp.float32),
                   jax.ShapeDtypeStruct((T, 1, C8), jnp.float32)),
        grid_spec=pltpu.PrefetchScalarGridSpec(
            num_scalar_prefetch=0,
            grid=(N, R),
            in_specs=[x_spec, w_spec, c_spec, m_spec],
            out_specs=(pl.BlockSpec((1, 1, C8), lambda n, r: (n * R + r, 0, 0)),
                       pl.BlockSpec((1, 1, C8), lambda n, r: (n * R + r, 0, 0)))),
        compiler_params=cparams,
    )(x_flat, w_taps, b_p, valid_mask)

    # cross-tile combine (tiny T x C8 math): BN stats over the FULL (N,H,W)
    # batch via the parallel-variance formula (numerically stable, train mode).
    s_t = psum.reshape(T, C8)
    ss_t = pssd.reshape(T, C8)
    n_tot = jnp.float32(T * cnt_tile)                    # == N*H*W
    mean = jnp.sum(s_t, axis=0, keepdims=True) / n_tot   # (1, C8)
    mean_t = s_t / jnp.float32(cnt_tile)
    ss_tot = (jnp.sum(ss_t, axis=0, keepdims=True)
              + jnp.float32(cnt_tile)
              * jnp.sum((mean_t - mean) ** 2, axis=0, keepdims=True))
    var = ss_tot / n_tot                                 # biased var (train mode)
    inv_std = lax.rsqrt(var + EPS)
    scale = g_p * inv_std
    shift = be_p - mean * scale

    out_wide = pl.pallas_call(
        conv_bn_relu_kernel,
        out_shape=jax.ShapeDtypeStruct((N, H * WP, C8), jnp.float32),
        grid_spec=pltpu.PrefetchScalarGridSpec(
            num_scalar_prefetch=0,
            grid=(N, R),
            in_specs=[x_spec, w_spec, c_spec, c_spec, c_spec],
            out_specs=pl.BlockSpec((1, TMW, C8), lambda n, r: (n, r, 0))),
        compiler_params=cparams,
    )(x_flat, w_taps, b_p, scale, shift)

    # Drop the 2 garbage columns / channel pad and deliver NCHW.
    # TODO(synk): the NCHW repack (slice + transpose over the small true-sized
    # output) is left to XLA; an in-kernel (rows,C)->(C,rows) relayout is not
    # worth it at Cout=8.
    out = out_wide.reshape(N, H, WP, C8)[:, :, :W, :Cout]
    return jnp.transpose(out, (0, 3, 1, 2))


def conv_block_reference(x_nchw, weight_oihw, bias, gamma, beta):
    """Pure-JAX reference (matches PyTorch ConvBlock forward in train mode)."""
    x_nhwc = jnp.transpose(x_nchw, (0, 2, 3, 1))
    w_hwio = jnp.transpose(weight_oihw, (2, 3, 1, 0))
    y = lax.conv_general_dilated(
        x_nhwc, w_hwio, window_strides=(1, 1), padding="SAME",
        dimension_numbers=("NHWC", "HWIO", "NHWC"))
    y = y + bias.reshape(1, 1, 1, -1)
    mean = jnp.mean(y, axis=(0, 1, 2), keepdims=True)
    var = jnp.mean((y - mean) ** 2, axis=(0, 1, 2), keepdims=True)
    y = (y - mean) * lax.rsqrt(var + EPS) * gamma.reshape(1, 1, 1, -1) \
        + beta.reshape(1, 1, 1, -1)
    y = jnp.maximum(y, 0.0)
    return jnp.transpose(y, (0, 3, 1, 2))


if __name__ == "__main__":
    # Small shapes consistent with the module: batch=2, in_channels=4,
    # out_channels=8, spatial=16x16.
    N, Cin, Cout, H, W = 2, 4, 8, 16, 16

    key = jax.random.PRNGKey(0)
    kx, kw, kb, kg, kbeta = jax.random.split(key, 5)

    x = jax.random.normal(kx, (N, Cin, H, W), dtype=jnp.float32)
    weight = jax.random.normal(kw, (Cout, Cin, KH, KW), dtype=jnp.float32) * 0.1
    bias = jax.random.normal(kb, (Cout,), dtype=jnp.float32) * 0.1
    gamma = 1.0 + 0.1 * jax.random.normal(kg, (Cout,), dtype=jnp.float32)
    beta = 0.1 * jax.random.normal(kbeta, (Cout,), dtype=jnp.float32)

    out = jax.block_until_ready(conv_block(x, weight, bias, gamma, beta))
    ref = jax.block_until_ready(
        conv_block_reference(x, weight, bias, gamma, beta))

    assert out.shape == (N, Cout, H, W)
    assert jnp.allclose(out, ref, rtol=1e-3, atol=1e-3), "mismatch vs reference"

    print("KERNEL_OK")
</pallas_src>

<mosaic_0001>
module attributes {stable_mosaic.version = 11 : i64} {
  func.func @stats_kernel(%arg0: i32, %arg1: i32, %arg2: memref<1x328x4xf32, #tpu.memory_space<vmem>>, %arg3: memref<9x4x8xf32, #tpu.memory_space<vmem>>, %arg4: memref<1x8xf32, #tpu.memory_space<vmem>>, %arg5: memref<72x1xf32, #tpu.memory_space<vmem>>, %arg6: memref<1x1x8xf32, #tpu.memory_space<vmem>>, %arg7: memref<1x1x8xf32, #tpu.memory_space<vmem>>) attributes {dimension_semantics = [#tpu.dimension_semantics<parallel>, #tpu.dimension_semantics<parallel>], iteration_bounds = array<i64: 2, 4>, scalar_prefetch = 0 : i64, scratch_operands = 0 : i64, tpu.core_type = #tpu.core_type<tc>, window_params = [{transform_indices = @transform_0, window_bounds = array<i64: 1, 328, 4>}, {pipeline_mode = #tpu.pipeline_mode<synchronous>, transform_indices = @transform_1, window_bounds = array<i64: 9, 4, 8>}, {pipeline_mode = #tpu.pipeline_mode<synchronous>, transform_indices = @transform_2, window_bounds = array<i64: 1, 8>}, {pipeline_mode = #tpu.pipeline_mode<synchronous>, transform_indices = @transform_3, window_bounds = array<i64: 72, 1>}, {transform_indices = @transform_4, window_bounds = array<i64: 1, 1, 8>}, {transform_indices = @transform_5, window_bounds = array<i64: 1, 1, 8>}]} {
    %c72_i32 = arith.constant 72 : i32
    %0 = arith.muli %arg1, %c72_i32 : i32
    %cst = arith.constant 0.000000e+00 : f32
    %1 = vector.broadcast %cst : f32 to vector<72x8xf32>
    %c0_i32 = arith.constant 0 : i32
    %2 = arith.addi %0, %c0_i32 : i32
    %c0_i32_0 = arith.constant 0 : i32
    %3 = arith.addi %2, %c0_i32_0 : i32
    %c0 = arith.constant 0 : index
    %4 = arith.index_cast %3 : i32 to index
    %c0_1 = arith.constant 0 : index
    %5 = vector.load %arg2[%c0, %4, %c0_1] : memref<1x328x4xf32, #tpu.memory_space<vmem>>, vector<1x72x4xf32>
    %6 = vector.shape_cast %5 : vector<1x72x4xf32> to vector<72x4xf32>
    %c0_2 = arith.constant 0 : index
    %c0_3 = arith.constant 0 : index
    %c0_4 = arith.constant 0 : index
    %7 = vector.load %arg3[%c0_2, %c0_3, %c0_4] : memref<9x4x8xf32, #tpu.memory_space<vmem>>, vector<1x4x8xf32>
    %8 = vector.shape_cast %7 : vector<1x4x8xf32> to vector<4x8xf32>
    %cst_5 = arith.constant dense<0.000000e+00> : vector<72x8xf32>
    %9 = tpu.matmul %6, %8, %cst_5 {dimension_numbers = #tpu.dot_dimension_numbers<[1], [0], [0], [1], [0, 0, 1, 1], [], []>} : vector<72x4xf32>, vector<4x8xf32>, vector<72x8xf32> -> vector<72x8xf32>
    %10 = arith.addf %1, %9 : vector<72x8xf32>
    %c0_i32_6 = arith.constant 0 : i32
    %11 = arith.addi %0, %c0_i32_6 : i32
    %c1_i32 = arith.constant 1 : i32
    %12 = arith.addi %11, %c1_i32 : i32
    %c0_7 = arith.constant 0 : index
    %13 = arith.index_cast %12 : i32 to index
    %c0_8 = arith.constant 0 : index
    %14 = vector.load %arg2[%c0_7, %13, %c0_8] : memref<1x328x4xf32, #tpu.memory_space<vmem>>, vector<1x72x4xf32>
    %15 = vector.shape_cast %14 : vector<1x72x4xf32> to vector<72x4xf32>
    %c1 = arith.constant 1 : index
    %c0_9 = arith.constant 0 : index
    %c0_10 = arith.constant 0 : index
    %16 = vector.load %arg3[%c1, %c0_9, %c0_10] : memref<9x4x8xf32, #tpu.memory_space<vmem>>, vector<1x4x8xf32>
    %17 = vector.shape_cast %16 : vector<1x4x8xf32> to vector<4x8xf32>
    %cst_11 = arith.constant dense<0.000000e+00> : vector<72x8xf32>
    %18 = tpu.matmul %15, %17, %cst_11 {dimension_numbers = #tpu.dot_dimension_numbers<[1], [0], [0], [1], [0, 0, 1, 1], [], []>} : vector<72x4xf32>, vector<4x8xf32>, vector<72x8xf32> -> vector<72x8xf32>
    %19 = arith.addf %10, %18 : vector<72x8xf32>
    %c0_i32_12 = arith.constant 0 : i32
    %20 = arith.addi %0, %c0_i32_12 : i32
    %c2_i32 = arith.constant 2 : i32
    %21 = arith.addi %20, %c2_i32 : i32
    %c0_13 = arith.constant 0 : index
    %22 = arith.index_cast %21 : i32 to index
    %c0_14 = arith.constant 0 : index
    %23 = vector.load %arg2[%c0_13, %22, %c0_14] : memref<1x328x4xf32, #tpu.memory_space<vmem>>, vector<1x72x4xf32>
    %24 = vector.shape_cast %23 : vector<1x72x4xf32> to vector<72x4xf32>
    %c2 = arith.constant 2 : index
    %c0_15 = arith.constant 0 : index
    %c0_16 = arith.constant 0 : index
    %25 = vector.load %arg3[%c2, %c0_15, %c0_16] : memref<9x4x8xf32, #tpu.memory_space<vmem>>, vector<1x4x8xf32>
    %26 = vector.shape_cast %25 : vector<1x4x8xf32> to vector<4x8xf32>
    %cst_17 = arith.constant dense<0.000000e+00> : vector<72x8xf32>
    %27 = tpu.matmul %24, %26, %cst_17 {dimension_numbers = #tpu.dot_dimension_numbers<[1], [0], [0], [1], [0, 0, 1, 1], [], []>} : vector<72x4xf32>, vector<4x8xf32>, vector<72x8xf32> -> vector<72x8xf32>
    %28 = arith.addf %19, %27 : vector<72x8xf32>
    %c18_i32 = arith.constant 18 : i32
    %29 = arith.addi %0, %c18_i32 : i32
    %c0_i32_18 = arith.constant 0 : i32
    %30 = arith.addi %29, %c0_i32_18 : i32
    %c0_19 = arith.constant 0 : index
    %31 = arith.index_cast %30 : i32 to index
    %c0_20 = arith.constant 0 : index
    %32 = vector.load %arg2[%c0_19, %31, %c0_20] : memref<1x328x4xf32, #tpu.memory_space<vmem>>, vector<1x72x4xf32>
    %33 = vector.shape_cast %32 : vector<1x72x4xf32> to vector<72x4xf32>
    %c3 = arith.constant 3 : index
    %c0_21 = arith.constant 0 : index
    %c0_22 = arith.constant 0 : index
    %34 = vector.load %arg3[%c3, %c0_21, %c0_22] : memref<9x4x8xf32, #tpu.memory_space<vmem>>, vector<1x4x8xf32>
    %35 = vector.shape_cast %34 : vector<1x4x8xf32> to vector<4x8xf32>
    %cst_23 = arith.constant dense<0.000000e+00> : vector<72x8xf32>
    %36 = tpu.matmul %33, %35, %cst_23 {dimension_numbers = #tpu.dot_dimension_numbers<[1], [0], [0], [1], [0, 0, 1, 1], [], []>} : vector<72x4xf32>, vector<4x8xf32>, vector<72x8xf32> -> vector<72x8xf32>
    %37 = arith.addf %28, %36 : vector<72x8xf32>
    %c18_i32_24 = arith.constant 18 : i32
    %38 = arith.addi %0, %c18_i32_24 : i32
    %c1_i32_25 = arith.constant 1 : i32
    %39 = arith.addi %38, %c1_i32_25 : i32
    %c0_26 = arith.constant 0 : index
    %40 = arith.index_cast %39 : i32 to index
    %c0_27 = arith.constant 0 : index
    %41 = vector.load %arg2[%c0_26, %40, %c0_27] : memref<1x328x4xf32, #tpu.memory_space<vmem>>, vector<1x72x4xf32>
    %42 = vector.shape_cast %41 : vector<1x72x4xf32> to vector<72x4xf32>
    %c4 = arith.constant 4 : index
    %c0_28 = arith.constant 0 : index
    %c0_29 = arith.constant 0 : index
    %43 = vector.load %arg3[%c4, %c0_28, %c0_29] : memref<9x4x8xf32, #tpu.memory_space<vmem>>, vector<1x4x8xf32>
    %44 = vector.shape_cast %43 : vector<1x4x8xf32> to vector<4x8xf32>
    %cst_30 = arith.constant dense<0.000000e+00> : vector<72x8xf32>
    %45 = tpu.matmul %42, %44, %cst_30 {dimension_numbers = #tpu.dot_dimension_numbers<[1], [0], [0], [1], [0, 0, 1, 1], [], []>} : vector<72x4xf32>, vector<4x8xf32>, vector<72x8xf32> -> vector<72x8xf32>
    %46 = arith.addf %37, %45 : vector<72x8xf32>
    %c18_i32_31 = arith.constant 18 : i32
    %47 = arith.addi %0, %c18_i32_31 : i32
    %c2_i32_32 = arith.constant 2 : i32
    %48 = arith.addi %47, %c2_i32_32 : i32
    %c0_33 = arith.constant 0 : index
    %49 = arith.index_cast %48 : i32 to index
    %c0_34 = arith.constant 0 : index
    %50 = vector.load %arg2[%c0_33, %49, %c0_34] : memref<1x328x4xf32, #tpu.memory_space<vmem>>, vector<1x72x4xf32>
    %51 = vector.shape_cast %50 : vector<1x72x4xf32> to vector<72x4xf32>
    %c5 = arith.constant 5 : index
    %c0_35 = arith.constant 0 : index
    %c0_36 = arith.constant 0 : index
    %52 = vector.load %arg3[%c5, %c0_35, %c0_36] : memref<9x4x8xf32, #tpu.memory_space<vmem>>, vector<1x4x8xf32>
    %53 = vector.shape_cast %52 : vector<1x4x8xf32> to vector<4x8xf32>
    %cst_37 = arith.constant dense<0.000000e+00> : vector<72x8xf32>
    %54 = tpu.matmul %51, %53, %cst_37 {dimension_numbers = #tpu.dot_dimension_numbers<[1], [0], [0], [1], [0, 0, 1, 1], [], []>} : vector<72x4xf32>, vector<4x8xf32>, vector<72x8xf32> -> vector<72x8xf32>
    %55 = arith.addf %46, %54 : vector<72x8xf32>
    %c36_i32 = arith.constant 36 : i32
    %56 = arith.addi %0, %c36_i32 : i32
    %c0_i32_38 = arith.constant 0 : i32
    %57 = arith.addi %56, %c0_i32_38 : i32
    %c0_39 = arith.constant 0 : index
    %58 = arith.index_cast %57 : i32 to index
    %c0_40 = arith.constant 0 : index
    %59 = vector.load %arg2[%c0_39, %58, %c0_40] : memref<1x328x4xf32, #tpu.memory_space<vmem>>, vector<1x72x4xf32>
    %60 = vector.shape_cast %59 : vector<1x72x4xf32> to vector<72x4xf32>
    %c6 = arith.constant 6 : index
    %c0_41 = arith.constant 0 : index
    %c0_42 = arith.constant 0 : index
    %61 = vector.load %arg3[%c6, %c0_41, %c0_42] : memref<9x4x8xf32, #tpu.memory_space<vmem>>, vector<1x4x8xf32>
    %62 = vector.shape_cast %61 : vector<1x4x8xf32> to vector<4x8xf32>
    %cst_43 = arith.constant dense<0.000000e+00> : vector<72x8xf32>
    %63 = tpu.matmul %60, %62, %cst_43 {dimension_numbers = #tpu.dot_dimension_numbers<[1], [0], [0], [1], [0, 0, 1, 1], [], []>} : vector<72x4xf32>, vector<4x8xf32>, vector<72x8xf32> -> vector<72x8xf32>
    %64 = arith.addf %55, %63 : vector<72x8xf32>
    %c36_i32_44 = arith.constant 36 : i32
    %65 = arith.addi %0, %c36_i32_44 : i32
    %c1_i32_45 = arith.constant 1 : i32
    %66 = arith.addi %65, %c1_i32_45 : i32
    %c0_46 = arith.constant 0 : index
    %67 = arith.index_cast %66 : i32 to index
    %c0_47 = arith.constant 0 : index
    %68 = vector.load %arg2[%c0_46, %67, %c0_47] : memref<1x328x4xf32, #tpu.memory_space<vmem>>, vector<1x72x4xf32>
    %69 = vector.shape_cast %68 : vector<1x72x4xf32> to vector<72x4xf32>
    %c7 = arith.constant 7 : index
    %c0_48 = arith.constant 0 : index
    %c0_49 = arith.constant 0 : index
    %70 = vector.load %arg3[%c7, %c0_48, %c0_49] : memref<9x4x8xf32, #tpu.memory_space<vmem>>, vector<1x4x8xf32>
    %71 = vector.shape_cast %70 : vector<1x4x8xf32> to vector<4x8xf32>
    %cst_50 = arith.constant dense<0.000000e+00> : vector<72x8xf32>
    %72 = tpu.matmul %69, %71, %cst_50 {dimension_numbers = #tpu.dot_dimension_numbers<[1], [0], [0], [1], [0, 0, 1, 1], [], []>} : vector<72x4xf32>, vector<4x8xf32>, vector<72x8xf32> -> vector<72x8xf32>
    %73 = arith.addf %64, %72 : vector<72x8xf32>
    %c36_i32_51 = arith.constant 36 : i32
    %74 = arith.addi %0, %c36_i32_51 : i32
    %c2_i32_52 = arith.constant 2 : i32
    %75 = arith.addi %74, %c2_i32_52 : i32
    %c0_53 = arith.constant 0 : index
    %76 = arith.index_cast %75 : i32 to index
    %c0_54 = arith.constant 0 : index
    %77 = vector.load %arg2[%c0_53, %76, %c0_54] : memref<1x328x4xf32, #tpu.memory_space<vmem>>, vector<1x72x4xf32>
    %78 = vector.shape_cast %77 : vector<1x72x4xf32> to vector<72x4xf32>
    %c8 = arith.constant 8 : index
    %c0_55 = arith.constant 0 : index
    %c0_56 = arith.constant 0 : index
    %79 = vector.load %arg3[%c8, %c0_55, %c0_56] : memref<9x4x8xf32, #tpu.memory_space<vmem>>, vector<1x4x8xf32>
    %80 = vector.shape_cast %79 : vector<1x4x8xf32> to vector<4x8xf32>
    %cst_57 = arith.constant dense<0.000000e+00> : vector<72x8xf32>
    %81 = tpu.matmul %78, %80, %cst_57 {dimension_numbers = #tpu.dot_dimension_numbers<[1], [0], [0], [1], [0, 0, 1, 1], [], []>} : vector<72x4xf32>, vector<4x8xf32>, vector<72x8xf32> -> vector<72x8xf32>
    %82 = arith.addf %73, %81 : vector<72x8xf32>
    %c0_58 = arith.constant 0 : index
    %c0_59 = arith.constant 0 : index
    %83 = vector.load %arg4[%c0_58, %c0_59] : memref<1x8xf32, #tpu.memory_space<vmem>>, vector<1x8xf32>
    %84 = vector.broadcast %83 : vector<1x8xf32> to vector<72x8xf32>
    %85 = arith.addf %82, %84 : vector<72x8xf32>
    %c0_60 = arith.constant 0 : index
    %c0_61 = arith.constant 0 : index
    %86 = vector.load %arg5[%c0_60, %c0_61] : memref<72x1xf32, #tpu.memory_space<vmem>>, vector<72x1xf32>
    %87 = vector.broadcast %86 : vector<72x1xf32> to vector<72x8xf32>
    %88 = arith.mulf %85, %87 : vector<72x8xf32>
    %cst_62 = arith.constant dense<0.000000e+00> : vector<8xf32>
    %89 = vector.multi_reduction <add>, %88, %cst_62 [0] : vector<72x8xf32> to vector<8xf32>
    %90 = vector.shape_cast %89 : vector<8xf32> to vector<1x8xf32>
    %cst_63 = arith.constant 1.562500e-02 : f32
    %91 = vector.broadcast %cst_63 : f32 to vector<1x8xf32>
    %92 = arith.mulf %90, %91 : vector<1x8xf32>
    %93 = vector.broadcast %92 : vector<1x8xf32> to vector<72x8xf32>
    %94 = arith.subf %85, %93 : vector<72x8xf32>
    %95 = vector.broadcast %86 : vector<72x1xf32> to vector<72x8xf32>
    %96 = arith.mulf %94, %95 : vector<72x8xf32>
    %c0_64 = arith.constant 0 : index
    %c0_65 = arith.constant 0 : index
    %c0_66 = arith.constant 0 : index
    %97 = vector.load %arg6[%c0_64, %c0_65, %c0_66] : memref<1x1x8xf32, #tpu.memory_space<vmem>>, vector<1x1x8xf32>
    %98 = vector.shape_cast %97 : vector<1x1x8xf32> to vector<1x8xf32>
    %99 = vector.shape_cast %90 : vector<1x8xf32> to vector<1x1x8xf32>
    tpu.vector_store %arg6[%c0_64, %c0_65, %c0_66], %99 {strides = array<i32>} : memref<1x1x8xf32, #tpu.memory_space<vmem>>, vector<1x1x8xf32>,
    %100 = arith.mulf %96, %96 : vector<72x8xf32>
    %cst_67 = arith.constant dense<0.000000e+00> : vector<8xf32>
    %101 = vector.multi_reduction <add>, %100, %cst_67 [0] : vector<72x8xf32> to vector<8xf32>
    %102 = vector.shape_cast %101 : vector<8xf32> to vector<1x8xf32>
    %c0_68 = arith.constant 0 : index
    %c0_69 = arith.constant 0 : index
    %c0_70 = arith.constant 0 : index
    %103 = vector.load %arg7[%c0_68, %c0_69, %c0_70] : memref<1x1x8xf32, #tpu.memory_space<vmem>>, vector<1x1x8xf32>
    %104 = vector.shape_cast %103 : vector<1x1x8xf32> to vector<1x8xf32>
    %105 = vector.shape_cast %102 : vector<1x8xf32> to vector<1x1x8xf32>
    tpu.vector_store %arg7[%c0_68, %c0_69, %c0_70], %105 {strides = array<i32>} : memref<1x1x8xf32, #tpu.memory_space<vmem>>, vector<1x1x8xf32>,
    return
  }
  func.func @transform_0(%arg0: i32, %arg1: i32) -> (i32, i32, i32) {
    %c0_i32 = arith.constant 0 : i32
    %c0_i32_0 = arith.constant 0 : i32
    %c0_i32_1 = arith.constant 0 : i32
    return %arg0, %c0_i32, %c0_i32_0 : i32, i32, i32
  }
  func.func @transform_1(%arg0: i32, %arg1: i32) -> (i32, i32, i32) {
    %c0_i32 = arith.constant 0 : i32
    %c0_i32_0 = arith.constant 0 : i32
    %c0_i32_1 = arith.constant 0 : i32
    %c0_i32_2 = arith.constant 0 : i32
    return %c0_i32, %c0_i32_0, %c0_i32_1 : i32, i32, i32
  }
  func.func @transform_2(%arg0: i32, %arg1: i32) -> (i32, i32) {
    %c0_i32 = arith.constant 0 : i32
    %c0_i32_0 = arith.constant 0 : i32
    %c0_i32_1 = arith.constant 0 : i32
    return %c0_i32, %c0_i32_0 : i32, i32
  }
  func.func @transform_3(%arg0: i32, %arg1: i32) -> (i32, i32) {
    %c0_i32 = arith.constant 0 : i32
    %c0_i32_0 = arith.constant 0 : i32
    %c0_i32_1 = arith.constant 0 : i32
    return %c0_i32, %c0_i32_0 : i32, i32
  }
  func.func @transform_4(%arg0: i32, %arg1: i32) -> (i32, i32, i32) {
    %c4_i32 = arith.constant 4 : i32
    %0 = arith.muli %arg0, %c4_i32 : i32
    %1 = arith.addi %0, %arg1 : i32
    %c0_i32 = arith.constant 0 : i32
    %c0_i32_0 = arith.constant 0 : i32
    %c0_i32_1 = arith.constant 0 : i32
    return %1, %c0_i32, %c0_i32_0 : i32, i32, i32
  }
  func.func @transform_5(%arg0: i32, %arg1: i32) -> (i32, i32, i32) {
    %c4_i32 = arith.constant 4 : i32
    %0 = arith.muli %arg0, %c4_i32 : i32
    %1 = arith.addi %0, %arg1 : i32
    %c0_i32 = arith.constant 0 : i32
    %c0_i32_0 = arith.constant 0 : i32
    %c0_i32_1 = arith.constant 0 : i32
    return %1, %c0_i32, %c0_i32_0 : i32, i32, i32
  }
}

</mosaic_0001>

<llo_original>
// kernel: tpu_custom_call.1
$region0: #{tpu_custom_call.1}
  #allocation0 [shape = 'u32[]', space=smem, size = 0x4, offset = 0x4, fixed_abs, tag = 'smem constant byte address 0x4 - core index']
  #allocation1 [shape = 'u32[144,128]{1,0:T(1,128)}', space=vmem, size = 0x12000, scoped, tag = 'internal scratch']
  %s0 = inlined_call_operand.vmem [shape: f32[2,328,4], index: 0, kind: input, shape index: {}]
  %s1 = inlined_call_operand.vmem [shape: f32[9,4,8], index: 1, kind: input, shape index: {}]
  %s2 = inlined_call_operand.vmem [shape: f32[1,8], index: 2, kind: input, shape index: {}]
  %s3 = inlined_call_operand.vmem [shape: f32[72,1], index: 3, kind: input, shape index: {}]
  %s4 = inlined_call_operand.hbm [shape: f32[8,1,8], index: 4, kind: output, shape index: {0}]
  %s5 = inlined_call_operand.hbm [shape: f32[8,1,8], index: 5, kind: output, shape index: {1}]
  %6 = xla_tuple %s4, %s5
  %s7 = sld [smem:[#allocation0]]
  $region57: #{tpu_custom_call.1} parent=0
    _
  %s9 = ssub.s32 1, %s7
  %s10 = scalar_select 0, %s9, %s7
  $region1: #{tpu_custom_call.1} parent=0
    #allocation2 [shape = 'u8[1024]{0}', space=vmem, size = 0x400, scoped, tag = 'output window, operand 0']
    #allocation3 [shape = 's32[2]{0}', space=sflag, size = 0x8, scoped, tag = 'scoped memory for tpu_custom_call.1']
    #allocation4 [shape = 'u8[1024]{0}', space=vmem, size = 0x400, scoped, tag = 'output window, operand 1']
    #allocation5 [shape = 's32[2]{0}', space=sflag, size = 0x8, scoped, tag = 'scoped memory for tpu_custom_call.1']
    %11 = vsyncpa [#allocation3], 0
    %s12 = scalar_lea.sflag [#allocation3], 1
    %13 = vsyncpa %s12, 0
    %14 = vsyncpa [#allocation5], 0
    %s15 = scalar_lea.sflag [#allocation5], 1
    %16 = vsyncpa %s15, 0
    loop: start=0, step=1, limit=10
    $region2: #{tpu_custom_call.1} parent=1 // loop_pre_header
      _
    $region3: #{tpu_custom_call.1} parent=1 // loop_header
      %s18 = sphi 0, %s22
      %p19 = scmp.ge.s32.totalorder %s18, 10
      %s25 = sphi 0, %s37
      %s26 = sphi 0, %s33
      %s27 = sphi 0, %s25
      %s28 = sphi 0, %s26
      %s29 = sphi 0, %s27
      %s30 = sphi 0, %s28
      %s40 = sphi 0, %s42
      %s43 = sphi 0, %s40
      %s44 = sphi 0, %s43
      %s60 = sphi 0, %s44
      %s64 = sphi 0, %s64
      %s66 = sphi 0, %s64
      %s67 = sphi 0, %s66
      %s81 = sphi 0, %s67
      %s85 = sphi 0, %s85
      %s87 = sphi 0, %s85
      %s88 = sphi 0, %s87
      %s102 = sphi 0, %s88
      %s106 = sphi 0, %s106
      %s108 = sphi 0, %s106
      %s109 = sphi 0, %s108
      %s123 = sphi 0, %s109
      %s133 = sphi 0, %s135
      %s136 = sphi 0, %s133
      %s137 = sphi 0, %s136
      %s153 = sphi 0, %s137
      %s163 = sphi 0, %s165
      %s166 = sphi 0, %s163
      %s167 = sphi 0, %s166
      %s183 = sphi 0, %s167
    $region4: #{tpu_custom_call.1} parent=1 // loop_header_branch
      %21 = sbr.rel (%p19) target = $region8
    $region5: #{tpu_custom_call.1} parent=1 // loop_body
      %s23 = ssub.s32 %s18, 1
      %s24 = ssub.s32 %s18, 2
      %s31 = sadd.s32 1, %s26
      %p32 = scmp.ge.s32.totalorder %s31, 4
      %s33 = scalar_select %p32, 0, %s31
      %s34 = sadd.s32 1, %s25
      %s35 = scalar_select %p32, %s34, %s25
      %p36 = scmp.ge.s32.totalorder %s35, 2
      %s37 = scalar_select %p36, 0, %s35
      %s38 = ssub.s32 %s25, %s37
      %p39 = scmp.eq.s32.totalorder %s38, 0
      %s41 = sadd.s32 %s40, 1
      %s42 = scalar_select %p39, %s40, %s41
      %p45 = pneg %p39
      %p46 = scmp.eq.s32.totalorder %s18, 7
      %p47 = por %p45, %p46
      %p48 = scmp.ne.s32.totalorder %s40, %s43
      %p49 = scmp.eq.s32.totalorder %s18, 0
      %p50 = por %p48, %p49
      %p51 = scmp.ne.s32.totalorder %s40, %s43
      %p52 = scmp.eq.s32.totalorder %s23, 7
      %p53 = por %p51, %p52
      %p54 = scmp.ne.s32.totalorder %s43, %s44
      %p55 = scmp.eq.s32.totalorder %s23, 0
      %p56 = por %p54, %p55
      %p57 = scmp.ne.s32.totalorder %s43, %s44
      %p58 = scmp.eq.s32.totalorder %s24, 7
      %p59 = por %p57, %p58
      %p61 = scmp.ne.s32.totalorder %s44, %s60
      %p62 = scmp.eq.s32.totalorder %s24, 0
      %p63 = por %p61, %p62
      %s65 = sadd.s32 %s64, 1
      %p68 = scmp.eq.s32.totalorder %s18, 7
      %p69 = scmp.ne.s32.totalorder %s64, %s66
      %p70 = scmp.eq.s32.totalorder %s18, 0
      %p71 = por %p69, %p70
      %p72 = scmp.ne.s32.totalorder %s64, %s66
      %p73 = scmp.eq.s32.totalorder %s23, 7
      %p74 = por %p72, %p73
      %p75 = scmp.ne.s32.totalorder %s66, %s67
      %p76 = scmp.eq.s32.totalorder %s23, 0
      %p77 = por %p75, %p76
      %p78 = scmp.ne.s32.totalorder %s66, %s67
      %p79 = scmp.eq.s32.totalorder %s24, 7
      %p80 = por %p78, %p79
      %p82 = scmp.ne.s32.totalorder %s67, %s81
      %p83 = scmp.eq.s32.totalorder %s24, 0
      %p84 = por %p82, %p83
      %s86 = sadd.s32 %s85, 1
      %p89 = scmp.eq.s32.totalorder %s18, 7
      %p90 = scmp.ne.s32.totalorder %s85, %s87
      %p91 = scmp.eq.s32.totalorder %s18, 0
      %p92 = por %p90, %p91
      %p93 = scmp.ne.s32.totalorder %s85, %s87
      %p94 = scmp.eq.s32.totalorder %s23, 7
      %p95 = por %p93, %p94
      %p96 = scmp.ne.s32.totalorder %s87, %s88
      %p97 = scmp.eq.s32.totalorder %s23, 0
      %p98 = por %p96, %p97
      %p99 = scmp.ne.s32.totalorder %s87, %s88
      %p100 = scmp.eq.s32.totalorder %s24, 7
      %p101 = por %p99, %p100
      %p103 = scmp.ne.s32.totalorder %s88, %s102
      %p104 = scmp.eq.s32.totalorder %s24, 0
      %p105 = por %p103, %p104
      %s107 = sadd.s32 %s106, 1
      %p110 = scmp.eq.s32.totalorder %s18, 7
      %p111 = scmp.ne.s32.totalorder %s106, %s108
      %p112 = scmp.eq.s32.totalorder %s18, 0
      %p113 = por %p111, %p112
      %p114 = scmp.ne.s32.totalorder %s106, %s108
      %p115 = scmp.eq.s32.totalorder %s23, 7
      %p116 = por %p114, %p115
      %p117 = scmp.ne.s32.totalorder %s108, %s109
      %p118 = scmp.eq.s32.totalorder %s23, 0
      %p119 = por %p117, %p118
      %p120 = scmp.ne.s32.totalorder %s108, %s109
      %p121 = scmp.eq.s32.totalorder %s24, 7
      %p122 = por %p120, %p121
      %p124 = scmp.ne.s32.totalorder %s109, %s123
      %p125 = scmp.eq.s32.totalorder %s24, 0
      %p126 = por %p124, %p125
      %s127 = smul.u32 %s25, 4
      %s128 = sadd.s32 %s127, %s26
      %s129 = smul.u32 %s37, 4
      %s130 = sadd.s32 %s129, %s33
      %s131 = ssub.s32 %s128, %s130
      %p132 = scmp.eq.s32.totalorder %s131, 0
      %s134 = sadd.s32 %s133, 1
      %s135 = scalar_select %p132, %s133, %s134
      %p138 = pneg %p132
      %p139 = scmp.eq.s32.totalorder %s18, 7
      %p140 = por %p138, %p139
      %p141 = scmp.ne.s32.totalorder %s133, %s136
      %p142 = scmp.eq.s32.totalorder %s18, 0
      %p143 = por %p141, %p142
      %p144 = scmp.ne.s32.totalorder %s133, %s136
      %p145 = scmp.eq.s32.totalorder %s23, 7
      %p146 = por %p144, %p145
      %p147 = scmp.ne.s32.totalorder %s136, %s137
      %p148 = scmp.eq.s32.totalorder %s23, 0
      %p149 = por %p147, %p148
      %p150 = scmp.ne.s32.totalorder %s136, %s137
      %p151 = scmp.eq.s32.totalorder %s24, 7
      %p152 = por %p150, %p151
      %p154 = scmp.ne.s32.totalorder %s137, %s153
      %p155 = scmp.eq.s32.totalorder %s24, 0
      %p156 = por %p154, %p155
      %s157 = smul.u32 %s25, 4
      %s158 = sadd.s32 %s157, %s26
      %s159 = smul.u32 %s37, 4
      %s160 = sadd.s32 %s159, %s33
      %s161 = ssub.s32 %s158, %s160
      %p162 = scmp.eq.s32.totalorder %s161, 0
      %s164 = sadd.s32 %s163, 1
      %s165 = scalar_select %p162, %s163, %s164
      %p168 = pneg %p162
      %p169 = scmp.eq.s32.totalorder %s18, 7
      %p170 = por %p168, %p169
      %p171 = scmp.ne.s32.totalorder %s163, %s166
      %p172 = scmp.eq.s32.totalorder %s18, 0
      %p173 = por %p171, %p172
      %p174 = scmp.ne.s32.totalorder %s163, %s166
      %p175 = scmp.eq.s32.totalorder %s23, 7
      %p176 = por %p174, %p175
      %p177 = scmp.ne.s32.totalorder %s166, %s167
      %p178 = scmp.eq.s32.totalorder %s23, 0
      %p179 = por %p177, %p178
      %p180 = scmp.ne.s32.totalorder %s166, %s167
      %p181 = scmp.eq.s32.totalorder %s24, 7
      %p182 = por %p180, %p181
      %p184 = scmp.ne.s32.totalorder %s167, %s183
      %p185 = scmp.eq.s32.totalorder %s24, 0
      %p186 = por %p184, %p185
      %p187 = scmp.le.s32.totalorder 1, %s18
      %p188 = scmp.lt.s32.totalorder %s18, 9
      %p189 = pnand %p187, %p188
      %p190 = pneg %p189
      // Predicated region
      $region9: #{tpu_custom_call.1} parent=5 // pred_check
        _
      $region10: #{tpu_custom_call.1} parent=5 // pred_check_branch
        %192 = sbr.rel (%p189) target = $region12
      $region11: #{tpu_custom_call.1} parent=5 // pred_region
        %s193 = ssub.s32 %s18, 1
        // Predicated region
        $region13: #{tpu_custom_call.1} parent=11 // pred_check
          %p194 = pneg %p77
        $region14: #{tpu_custom_call.1} parent=11 // pred_check_branch
          %196 = sbr.rel (%p194) target = $region16
        $region15: #{tpu_custom_call.1} parent=11 // pred_region
          _
        $region16: #{tpu_custom_call.1} parent=11 // pred_fallthru
          _
        // Predicated region
        $region17: #{tpu_custom_call.1} parent=11 // pred_check
          %p197 = pneg %p98
        $region18: #{tpu_custom_call.1} parent=11 // pred_check_branch
          %199 = sbr.rel (%p197) target = $region20
        $region19: #{tpu_custom_call.1} parent=11 // pred_region
          _
        $region20: #{tpu_custom_call.1} parent=11 // pred_fallthru
          _
        // Predicated region
        $region21: #{tpu_custom_call.1} parent=11 // pred_check
          %p200 = pneg %p119
        $region22: #{tpu_custom_call.1} parent=11 // pred_check_branch
          %202 = sbr.rel (%p200) target = $region24
        $region23: #{tpu_custom_call.1} parent=11 // pred_region
          _
        $region24: #{tpu_custom_call.1} parent=11 // pred_fallthru
          _
      $region12: #{tpu_custom_call.1} parent=5 // pred_fallthru
        _
      %p203 = scmp.lt.s32.totalorder %s18, 8
      // Predicated region
      $region25: #{tpu_custom_call.1} parent=5 // pred_check
        %p204 = pneg %p203
      $region26: #{tpu_custom_call.1} parent=5 // pred_check_branch
        %206 = sbr.rel (%p204) target = $region28
      $region27: #{tpu_custom_call.1} parent=5 // pred_region
        // Predicated region
        $region29: #{tpu_custom_call.1} parent=27 // pred_check
          %p207 = pneg %p50
        $region30: #{tpu_custom_call.1} parent=27 // pred_check_branch
          %209 = sbr.rel (%p207) target = $region32
        $region31: #{tpu_custom_call.1} parent=27 // pred_region
          %p210 = scmp.lt.s32.totalorder %s25, 1
          %s211 = scalar_select %p210, %s25, 1
          %s212 = smul.addr %s211, 41
          %s213 = smul.addr %s212, 8
          %s214 = scalar_lea.vmem %s0, %s213
        $region32: #{tpu_custom_call.1} parent=27 // pred_fallthru
          _
      $region28: #{tpu_custom_call.1} parent=5 // pred_fallthru
        _
      %p215 = scmp.le.s32.totalorder 1, %s18
      %p216 = scmp.lt.s32.totalorder %s18, 9
      %p217 = pnand %p215, %p216
      %p218 = pneg %p217
      // Predicated region
      $region33: #{tpu_custom_call.1} parent=5 // pred_check
        _
      $region34: #{tpu_custom_call.1} parent=5 // pred_check_branch
        %220 = sbr.rel (%p217) target = $region36
      $region35: #{tpu_custom_call.1} parent=5 // pred_region
        %s221 = ssub.s32 %s18, 1
        %p222 = scmp.lt.s32.totalorder %s27, 1
        %s223 = scalar_select %p222, %s27, 1
        %s224 = smul.addr %s223, 41
        %s225 = smul.addr %s224, 8
        %s226 = scalar_lea.vmem %s0, %s225
        %p227 = pneg %p56
        %p228 = pneg %p53
        %p229 = pneg %p77
        %p230 = pneg %p74
        %p231 = pneg %p98
        %p232 = pneg %p95
        %p233 = pneg %p119
        %p234 = pneg %p116
        %p235 = pneg %p149
        %p236 = pneg %p146
        %s237 = sand.u32 %s136, 1
        %s238 = scalar_lea.sflag [#allocation3], %s237
        %s239 = sand.u32 %s136, 1
        %s240 = scalar_lea.vmem [#allocation2], %s239
        %p241 = pneg %p179
        %p242 = pneg %p176
        %s243 = sand.u32 %s166, 1
        %s244 = scalar_lea.sflag [#allocation5], %s243
        %s245 = sand.u32 %s166, 1
        %s246 = scalar_lea.vmem [#allocation4], %s245
        %p247 = scmp.lt.s32.totalorder %s27, 1
        %s248 = scalar_select %p247, %s27, 1
        %s249 = smul.addr %s248, 41
        %s250 = smul.addr %s249, 8
        %s251 = scalar_lea.vmem %s0, %s250
        %s252 = smul.u32 %s27, 4
        %s253 = sadd.s32 %s252, %s28
        %s254 = smul.u32 %s27, 4
        %s255 = sadd.s32 %s254, %s28
        %s256 = smul.u32 %s28, 72
        %s257 = scalar_lea.vmem %s251, %s256
        %v258 = vld [vmem:[%s257] sm:$0xff]
        %v259 = vld [vmem:[%s257 + $0x8] sm:$0xff]
        %v260 = vld [vmem:[%s257 + $0x10] sm:$0xff]
        %v261 = vld [vmem:[%s257 + $0x18] sm:$0xff]
        %v262 = vld [vmem:[%s257 + $0x20] sm:$0xff]
        %v263 = vld [vmem:[%s257 + $0x28] sm:$0xff]
        %v264 = vld [vmem:[%s257 + $0x30] sm:$0xff]
        %v265 = vld [vmem:[%s257 + $0x38] sm:$0xff]
        %v266 = vld [vmem:[%s257 + $0x40] sm:$0xff]
        %v267 = vld [vmem:[%s1] sm:$0xf]
        %s268 = sadd.s32 %s256, 1
        %s269 = scalar_lea.vmem %s251, %s268
        %v270 = vld [vmem:[%s269] sm:$0xff]
        %v271 = vld [vmem:[%s269 + $0x8] sm:$0xff]
        %v272 = vld [vmem:[%s269 + $0x10] sm:$0xff]
        %v273 = vld [vmem:[%s269 + $0x18] sm:$0xff]
        %v274 = vld [vmem:[%s269 + $0x20] sm:$0xff]
        %v275 = vld [vmem:[%s269 + $0x28] sm:$0xff]
        %v276 = vld [vmem:[%s269 + $0x30] sm:$0xff]
        %v277 = vld [vmem:[%s269 + $0x38] sm:$0xff]
        %v278 = vld [vmem:[%s269 + $0x40] sm:$0xff]
        %s279 = scalar_lea.vmem %s1, 4
        %v280 = vld [vmem:[%s279] sm:$0xf]
        %vm281 = vcmask 31744
        %v283 = vsel %vm281, %v270, 0
        %v286 = vsel %vm281, %v271, 0
        %v289 = vsel %vm281, %v272, 0
        %v292 = vsel %vm281, %v273, 0
        %v295 = vsel %vm281, %v274, 0
        %v298 = vsel %vm281, %v275, 0
        %v301 = vsel %vm281, %v276, 0
        %v304 = vsel %vm281, %v277, 0
        %v307 = vsel %vm281, %v278, 0
        %vm309 = vcmask 1043456
        %v311 = vsel %vm309, %v280, 0
        %313 = vmatprep.subr.mxu0 0.0
        %314 = vmatpush1.msra.mxu0 0.0
        %315 = vmatprep.subr.mxu0 0.0
        %316 = vmatpush1.msra.mxu0 0.0
        %317 = vmatprep.subr.mxu0 0.0
        %318 = vmatpush1.msra.mxu0 0.0
        %319 = vmatprep.subr.mxu0 0.0
        %320 = vmatpush1.msra.mxu0 0.0
        %321 = vmatprep.subr.mxu0 0.0
        %322 = vmatpush1.msra.mxu0 0.0
        %323 = vmatprep.subr.mxu0 0.0
        %324 = vmatpush1.msra.mxu0 0.0
        %325 = vmatprep.subr.mxu0 0.0
        %326 = vmatpush1.msra.mxu0 0.0
        %327 = vmatprep.subr.mxu0 0.0
        %328 = vmatpush1.msra.mxu0 0.0
        %329 = vmatprep.subr.mxu0 0.0
        %330 = vmatpush1.msra.mxu0 0.0
        %331 = vmatprep.subr.mxu0 0.0
        %332 = vmatpush1.msra.mxu0 0.0
        %333 = vmatprep.subr.mxu0 0.0
        %334 = vmatpush1.msra.mxu0 0.0
        %335 = vmatprep.subr.mxu0 0.0
        %336 = vmatpush1.msra.mxu0 0.0
        %337 = vmatprep.subr.mxu0 0.0
        %338 = vmatpush1.msra.mxu0 0.0
        %339 = vmatprep.subr.mxu0 0.0
        %340 = vmatpush1.msra.mxu0 0.0
        %341 = vmatprep.subr.mxu0 0.0
        %342 = vmatpush1.msra.mxu0 0.0
        %343 = vmatprep.subr.mxu0 0.0
        %344 = vmatpush1.msra.mxu0 %v311
        %345 = vmatprep.subr.mxu0 0.0
        %346 = vmatpush2.msra.mxu0 0.0
        %347 = vmatprep.subr.mxu0 0.0
        %348 = vmatpush2.msra.mxu0 0.0
        %349 = vmatprep.subr.mxu0 0.0
        %350 = vmatpush2.msra.mxu0 0.0
        %351 = vmatprep.subr.mxu0 0.0
        %352 = vmatpush2.msra.mxu0 0.0
        %353 = vmatprep.subr.mxu0 0.0
        %354 = vmatpush2.msra.mxu0 0.0
        %355 = vmatprep.subr.mxu0 0.0
        %356 = vmatpush2.msra.mxu0 0.0
        %357 = vmatprep.subr.mxu0 0.0
        %358 = vmatpush2.msra.mxu0 0.0
        %359 = vmatprep.subr.mxu0 0.0
        %360 = vmatpush2.msra.mxu0 0.0
        %361 = vmatprep.subr.mxu0 0.0
        %362 = vmatpush2.msra.mxu0 0.0
        %363 = vmatprep.subr.mxu0 0.0
        %364 = vmatpush2.msra.mxu0 0.0
        %365 = vmatprep.subr.mxu0 0.0
        %366 = vmatpush2.msra.mxu0 0.0
        %367 = vmatprep.subr.mxu0 0.0
        %368 = vmatpush2.msra.mxu0 0.0
        %369 = vmatprep.subr.mxu0 0.0
        %370 = vmatpush2.msra.mxu0 0.0
        %371 = vmatprep.subr.mxu0 0.0
        %372 = vmatpush2.msra.mxu0 0.0
        %373 = vmatprep.subr.mxu0 0.0
        %374 = vmatpush2.msra.mxu0 0.0
        %375 = vmatprep.subr.mxu0 0.0
        %376 = vmatpush2.msra.mxu0 0.0
        %377 = vmatprep.mubr.f32.mxu0 0.0
        %378 = vmatmul.mubr.f32.gmra.mxu0 %v283
        %v379 = vpop.f32.mrf.mxu0
        %v380 = vadd.f32 0.0, %v379
        %v381 = vpop.f32.mrf.mxu0
        %382 = vmatprep.mubr.f32.mxu0 0.0
        %383 = vmatmul.mubr.f32.gmra.mxu0 %v286
        %v384 = vpop.f32.mrf.mxu0
        %v385 = vadd.f32 0.0, %v384
        %v386 = vpop.f32.mrf.mxu0
        %387 = vmatprep.mubr.f32.mxu0 0.0
        %388 = vmatmul.mubr.f32.gmra.mxu0 %v289
        %v389 = vpop.f32.mrf.mxu0
        %v390 = vadd.f32 0.0, %v389
        %v391 = vpop.f32.mrf.mxu0
        %392 = vmatprep.mubr.f32.mxu0 0.0
        %393 = vmatmul.mubr.f32.gmra.mxu0 %v292
        %v394 = vpop.f32.mrf.mxu0
        %v395 = vadd.f32 0.0, %v394
        %v396 = vpop.f32.mrf.mxu0
        %397 = vmatprep.mubr.f32.mxu0 0.0
        %398 = vmatmul.mubr.f32.gmra.mxu0 %v295
        %v399 = vpop.f32.mrf.mxu0
        %v400 = vadd.f32 0.0, %v399
        %v401 = vpop.f32.mrf.mxu0
        %402 = vmatprep.mubr.f32.mxu0 0.0
        %403 = vmatmul.mubr.f32.gmra.mxu0 %v298
        %v404 = vpop.f32.mrf.mxu0
        %v405 = vadd.f32 0.0, %v404
        %v406 = vpop.f32.mrf.mxu0
        %407 = vmatprep.mubr.f32.mxu0 0.0
        %408 = vmatmul.mubr.f32.gmra.mxu0 %v301
        %v409 = vpop.f32.mrf.mxu0
        %v410 = vadd.f32 0.0, %v409
        %v411 = vpop.f32.mrf.mxu0
        %412 = vmatprep.mubr.f32.mxu0 0.0
        %413 = vmatmul.mubr.f32.gmra.mxu0 %v304
        %v414 = vpop.f32.mrf.mxu0
        %v415 = vadd.f32 0.0, %v414
        %v416 = vpop.f32.mrf.mxu0
        %417 = vmatprep.mubr.f32.mxu0 0.0
        %418 = vmatmul.mubr.f32.gmra.mxu0 %v307
        %v419 = vpop.f32.mrf.mxu0
        %v420 = vadd.f32 0.0, %v419
        %v421 = vpop.f32.mrf.mxu0
        %422 = vdwg.mxu0
        %v424 = vsel %vm281, %v258, 0
        %v427 = vsel %vm281, %v259, 0
        %v430 = vsel %vm281, %v260, 0
        %v433 = vsel %vm281, %v261, 0
        %v436 = vsel %vm281, %v262, 0
        %v439 = vsel %vm281, %v263, 0
        %v442 = vsel %vm281, %v264, 0
        %v445 = vsel %vm281, %v265, 0
        %v448 = vsel %vm281, %v266, 0
        %v451 = vsel %vm309, %v267, 0
        %453 = vmatprep.subr.mxu0 0.0
        %454 = vmatpush1.msra.mxu0 0.0
        %455 = vmatprep.subr.mxu0 0.0
        %456 = vmatpush1.msra.mxu0 0.0
        %457 = vmatprep.subr.mxu0 0.0
        %458 = vmatpush1.msra.mxu0 0.0
        %459 = vmatprep.subr.mxu0 0.0
        %460 = vmatpush1.msra.mxu0 0.0
        %461 = vmatprep.subr.mxu0 0.0
        %462 = vmatpush1.msra.mxu0 0.0
        %463 = vmatprep.subr.mxu0 0.0
        %464 = vmatpush1.msra.mxu0 0.0
        %465 = vmatprep.subr.mxu0 0.0
        %466 = vmatpush1.msra.mxu0 0.0
        %467 = vmatprep.subr.mxu0 0.0
        %468 = vmatpush1.msra.mxu0 0.0
        %469 = vmatprep.subr.mxu0 0.0
        %470 = vmatpush1.msra.mxu0 0.0
        %471 = vmatprep.subr.mxu0 0.0
        %472 = vmatpush1.msra.mxu0 0.0
        %473 = vmatprep.subr.mxu0 0.0
        %474 = vmatpush1.msra.mxu0 0.0
        %475 = vmatprep.subr.mxu0 0.0
        %476 = vmatpush1.msra.mxu0 0.0
        %477 = vmatprep.subr.mxu0 0.0
        %478 = vmatpush1.msra.mxu0 0.0
        %479 = vmatprep.subr.mxu0 0.0
        %480 = vmatpush1.msra.mxu0 0.0
        %481 = vmatprep.subr.mxu0 0.0
        %482 = vmatpush1.msra.mxu0 0.0
        %483 = vmatprep.subr.mxu0 0.0
        %484 = vmatpush1.msra.mxu0 %v451
        %485 = vmatprep.subr.mxu0 0.0
        %486 = vmatpush2.msra.mxu0 0.0
        %487 = vmatprep.subr.mxu0 0.0
        %488 = vmatpush2.msra.mxu0 0.0
        %489 = vmatprep.subr.mxu0 0.0
        %490 = vmatpush2.msra.mxu0 0.0
        %491 = vmatprep.subr.mxu0 0.0
        %492 = vmatpush2.msra.mxu0 0.0
        %493 = vmatprep.subr.mxu0 0.0
        %494 = vmatpush2.msra.mxu0 0.0
        %495 = vmatprep.subr.mxu0 0.0
        %496 = vmatpush2.msra.mxu0 0.0
        %497 = vmatprep.subr.mxu0 0.0
        %498 = vmatpush2.msra.mxu0 0.0
        %499 = vmatprep.subr.mxu0 0.0
        %500 = vmatpush2.msra.mxu0 0.0
        %501 = vmatprep.subr.mxu0 0.0
        %502 = vmatpush2.msra.mxu0 0.0
        %503 = vmatprep.subr.mxu0 0.0
        %504 = vmatpush2.msra.mxu0 0.0
        %505 = vmatprep.subr.mxu0 0.0
        %506 = vmatpush2.msra.mxu0 0.0
        %507 = vmatprep.subr.mxu0 0.0
        %508 = vmatpush2.msra.mxu0 0.0
        %509 = vmatprep.subr.mxu0 0.0
        %510 = vmatpush2.msra.mxu0 0.0
        %511 = vmatprep.subr.mxu0 0.0
        %512 = vmatpush2.msra.mxu0 0.0
        %513 = vmatprep.subr.mxu0 0.0
        %514 = vmatpush2.msra.mxu0 0.0
        %515 = vmatprep.subr.mxu0 0.0
        %516 = vmatpush2.msra.mxu0 0.0
        %517 = vmatprep.mubr.f32.mxu0 0.0
        %518 = vmatmul.mubr.f32.gmra.mxu0 %v424
        %v519 = vpop.f32.mrf.mxu0
        %v520 = vadd.f32 %v380, %v519
        %v521 = vpop.f32.mrf.mxu0
        %522 = vmatprep.mubr.f32.mxu0 0.0
        %523 = vmatmul.mubr.f32.gmra.mxu0 %v427
        %v524 = vpop.f32.mrf.mxu0
        %v525 = vadd.f32 %v385, %v524
        %v526 = vpop.f32.mrf.mxu0
        %527 = vmatprep.mubr.f32.mxu0 0.0
        %528 = vmatmul.mubr.f32.gmra.mxu0 %v430
        %v529 = vpop.f32.mrf.mxu0
        %v530 = vadd.f32 %v390, %v529
        %v531 = vpop.f32.mrf.mxu0
        %532 = vmatprep.mubr.f32.mxu0 0.0
        %533 = vmatmul.mubr.f32.gmra.mxu0 %v433
        %v534 = vpop.f32.mrf.mxu0
        %v535 = vadd.f32 %v395, %v534
        %v536 = vpop.f32.mrf.mxu0
        %537 = vmatprep.mubr.f32.mxu0 0.0
        %538 = vmatmul.mubr.f32.gmra.mxu0 %v436
        %v539 = vpop.f32.mrf.mxu0
        %v540 = vadd.f32 %v400, %v539
        %v541 = vpop.f32.mrf.mxu0
        %542 = vmatprep.mubr.f32.mxu0 0.0
        %543 = vmatmul.mubr.f32.gmra.mxu0 %v439
        %v544 = vpop.f32.mrf.mxu0
        %v545 = vadd.f32 %v405, %v544
        %v546 = vpop.f32.mrf.mxu0
        %547 = vmatprep.mubr.f32.mxu0 0.0
        %548 = vmatmul.mubr.f32.gmra.mxu0 %v442
        %v549 = vpop.f32.mrf.mxu0
        %v550 = vadd.f32 %v410, %v549
        %v551 = vpop.f32.mrf.mxu0
        %552 = vmatprep.mubr.f32.mxu0 0.0
        %553 = vmatmul.mubr.f32.gmra.mxu0 %v445
        %v554 = vpop.f32.mrf.mxu0
        %v555 = vadd.f32 %v415, %v554
        %v556 = vpop.f32.mrf.mxu0
        %557 = vmatprep.mubr.f32.mxu0 0.0
        %558 = vmatmul.mubr.f32.gmra.mxu0 %v448
        %v559 = vpop.f32.mrf.mxu0
        %v560 = vadd.f32 %v420, %v559
        %v561 = vpop.f32.mrf.mxu0
        %562 = vdwg.mxu0
        %s563 = sadd.s32 %s256, 2
        %s564 = scalar_lea.vmem %s251, %s563
        %v565 = vld [vmem:[%s564] sm:$0xff]
        %v566 = vld [vmem:[%s564 + $0x8] sm:$0xff]
        %v567 = vld [vmem:[%s564 + $0x10] sm:$0xff]
        %v568 = vld [vmem:[%s564 + $0x18] sm:$0xff]
        %v569 = vld [vmem:[%s564 + $0x20] sm:$0xff]
        %v570 = vld [vmem:[%s564 + $0x28] sm:$0xff]
        %v571 = vld [vmem:[%s564 + $0x30] sm:$0xff]
        %v572 = vld [vmem:[%s564 + $0x38] sm:$0xff]
        %v573 = vld [vmem:[%s564 + $0x40] sm:$0xff]
        %s574 = scalar_lea.vmem %s1, 8
        %v575 = vld [vmem:[%s574] sm:$0xf]
        %v577 = vsel %vm281, %v565, 0
        %v580 = vsel %vm281, %v566, 0
        %v583 = vsel %vm281, %v567, 0
        %v586 = vsel %vm281, %v568, 0
        %v589 = vsel %vm281, %v569, 0
        %v592 = vsel %vm281, %v570, 0
        %v595 = vsel %vm281, %v571, 0
        %v598 = vsel %vm281, %v572, 0
        %v601 = vsel %vm281, %v573, 0
        %v604 = vsel %vm309, %v575, 0
        %606 = vmatprep.subr.mxu0 0.0
        %607 = vmatpush1.msra.mxu0 0.0
        %608 = vmatprep.subr.mxu0 0.0
        %609 = vmatpush1.msra.mxu0 0.0
        %610 = vmatprep.subr.mxu0 0.0
        %611 = vmatpush1.msra.mxu0 0.0
        %612 = vmatprep.subr.mxu0 0.0
        %613 = vmatpush1.msra.mxu0 0.0
        %614 = vmatprep.subr.mxu0 0.0
        %615 = vmatpush1.msra.mxu0 0.0
        %616 = vmatprep.subr.mxu0 0.0
        %617 = vmatpush1.msra.mxu0 0.0
        %618 = vmatprep.subr.mxu0 0.0
        %619 = vmatpush1.msra.mxu0 0.0
        %620 = vmatprep.subr.mxu0 0.0
        %621 = vmatpush1.msra.mxu0 0.0
        %622 = vmatprep.subr.mxu0 0.0
        %623 = vmatpush1.msra.mxu0 0.0
        %624 = vmatprep.subr.mxu0 0.0
        %625 = vmatpush1.msra.mxu0 0.0
        %626 = vmatprep.subr.mxu0 0.0
        %627 = vmatpush1.msra.mxu0 0.0
        %628 = vmatprep.subr.mxu0 0.0
        %629 = vmatpush1.msra.mxu0 0.0
        %630 = vmatprep.subr.mxu0 0.0
        %631 = vmatpush1.msra.mxu0 0.0
        %632 = vmatprep.subr.mxu0 0.0
        %633 = vmatpush1.msra.mxu0 0.0
        %634 = vmatprep.subr.mxu0 0.0
        %635 = vmatpush1.msra.mxu0 0.0
        %636 = vmatprep.subr.mxu0 0.0
        %637 = vmatpush1.msra.mxu0 %v604
        %638 = vmatprep.subr.mxu0 0.0
        %639 = vmatpush2.msra.mxu0 0.0
        %640 = vmatprep.subr.mxu0 0.0
        %641 = vmatpush2.msra.mxu0 0.0
        %642 = vmatprep.subr.mxu0 0.0
        %643 = vmatpush2.msra.mxu0 0.0
        %644 = vmatprep.subr.mxu0 0.0
        %645 = vmatpush2.msra.mxu0 0.0
        %646 = vmatprep.subr.mxu0 0.0
        %647 = vmatpush2.msra.mxu0 0.0
        %648 = vmatprep.subr.mxu0 0.0
        %649 = vmatpush2.msra.mxu0 0.0
        %650 = vmatprep.subr.mxu0 0.0
        %651 = vmatpush2.msra.mxu0 0.0
        %652 = vmatprep.subr.mxu0 0.0
        %653 = vmatpush2.msra.mxu0 0.0
        %654 = vmatprep.subr.mxu0 0.0
        %655 = vmatpush2.msra.mxu0 0.0
        %656 = vmatprep.subr.mxu0 0.0
        %657 = vmatpush2.msra.mxu0 0.0
        %658 = vmatprep.subr.mxu0 0.0
        %659 = vmatpush2.msra.mxu0 0.0
        %660 = vmatprep.subr.mxu0 0.0
        %661 = vmatpush2.msra.mxu0 0.0
        %662 = vmatprep.subr.mxu0 0.0
        %663 = vmatpush2.msra.mxu0 0.0
        %664 = vmatprep.subr.mxu0 0.0
        %665 = vmatpush2.msra.mxu0 0.0
        %666 = vmatprep.subr.mxu0 0.0
        %667 = vmatpush2.msra.mxu0 0.0
        %668 = vmatprep.subr.mxu0 0.0
        %669 = vmatpush2.msra.mxu0 0.0
        %670 = vmatprep.mubr.f32.mxu0 0.0
        %671 = vmatmul.mubr.f32.gmra.mxu0 %v577
        %v672 = vpop.f32.mrf.mxu0
        %v673 = vadd.f32 0.0, %v672
        %v674 = vpop.f32.mrf.mxu0
        %675 = vmatprep.mubr.f32.mxu0 0.0
        %676 = vmatmul.mubr.f32.gmra.mxu0 %v580
        %v677 = vpop.f32.mrf.mxu0
        %v678 = vadd.f32 0.0, %v677
        %v679 = vpop.f32.mrf.mxu0
        %680 = vmatprep.mubr.f32.mxu0 0.0
        %681 = vmatmul.mubr.f32.gmra.mxu0 %v583
        %v682 = vpop.f32.mrf.mxu0
        %v683 = vadd.f32 0.0, %v682
        %v684 = vpop.f32.mrf.mxu0
        %685 = vmatprep.mubr.f32.mxu0 0.0
        %686 = vmatmul.mubr.f32.gmra.mxu0 %v586
        %v687 = vpop.f32.mrf.mxu0
        %v688 = vadd.f32 0.0, %v687
        %v689 = vpop.f32.mrf.mxu0
        %690 = vmatprep.mubr.f32.mxu0 0.0
        %691 = vmatmul.mubr.f32.gmra.mxu0 %v589
        %v692 = vpop.f32.mrf.mxu0
        %v693 = vadd.f32 0.0, %v692
        %v694 = vpop.f32.mrf.mxu0
        %695 = vmatprep.mubr.f32.mxu0 0.0
        %696 = vmatmul.mubr.f32.gmra.mxu0 %v592
        %v697 = vpop.f32.mrf.mxu0
        %v698 = vadd.f32 0.0, %v697
        %v699 = vpop.f32.mrf.mxu0
        %700 = vmatprep.mubr.f32.mxu0 0.0
        %701 = vmatmul.mubr.f32.gmra.mxu0 %v595
        %v702 = vpop.f32.mrf.mxu0
        %v703 = vadd.f32 0.0, %v702
        %v704 = vpop.f32.mrf.mxu0
        %705 = vmatprep.mubr.f32.mxu0 0.0
        %706 = vmatmul.mubr.f32.gmra.mxu0 %v598
        %v707 = vpop.f32.mrf.mxu0
        %v708 = vadd.f32 0.0, %v707
        %v709 = vpop.f32.mrf.mxu0
        %710 = vmatprep.mubr.f32.mxu0 0.0
        %711 = vmatmul.mubr.f32.gmra.mxu0 %v601
        %v712 = vpop.f32.mrf.mxu0
        %v713 = vadd.f32 0.0, %v712
        %v714 = vpop.f32.mrf.mxu0
        %715 = vdwg.mxu0
        %v716 = vadd.f32 %v520, %v673
        %v717 = vadd.f32 %v525, %v678
        %v718 = vadd.f32 %v530, %v683
        %v719 = vadd.f32 %v535, %v688
        %v720 = vadd.f32 %v540, %v693
        %v721 = vadd.f32 %v545, %v698
        %v722 = vadd.f32 %v550, %v703
        %v723 = vadd.f32 %v555, %v708
        %v724 = vadd.f32 %v560, %v713
        %s725 = sadd.s32 %s256, 18
        %s726 = scalar_lea.vmem %s251, %s725
        %v727 = vld [vmem:[%s726] sm:$0xff]
        %v728 = vld [vmem:[%s726 + $0x8] sm:$0xff]
        %v729 = vld [vmem:[%s726 + $0x10] sm:$0xff]
        %v730 = vld [vmem:[%s726 + $0x18] sm:$0xff]
        %v731 = vld [vmem:[%s726 + $0x20] sm:$0xff]
        %v732 = vld [vmem:[%s726 + $0x28] sm:$0xff]
        %v733 = vld [vmem:[%s726 + $0x30] sm:$0xff]
        %v734 = vld [vmem:[%s726 + $0x38] sm:$0xff]
        %v735 = vld [vmem:[%s726 + $0x40] sm:$0xff]
        %s736 = scalar_lea.vmem %s1, 12
        %v737 = vld [vmem:[%s736] sm:$0xf]
        %v739 = vsel %vm281, %v727, 0
        %v742 = vsel %vm281, %v728, 0
        %v745 = vsel %vm281, %v729, 0
        %v748 = vsel %vm281, %v730, 0
        %v751 = vsel %vm281, %v731, 0
        %v754 = vsel %vm281, %v732, 0
        %v757 = vsel %vm281, %v733, 0
        %v760 = vsel %vm281, %v734, 0
        %v763 = vsel %vm281, %v735, 0
        %v766 = vsel %vm309, %v737, 0
        %768 = vmatprep.subr.mxu0 0.0
        %769 = vmatpush1.msra.mxu0 0.0
        %770 = vmatprep.subr.mxu0 0.0
        %771 = vmatpush1.msra.mxu0 0.0
        %772 = vmatprep.subr.mxu0 0.0
        %773 = vmatpush1.msra.mxu0 0.0
        %774 = vmatprep.subr.mxu0 0.0
        %775 = vmatpush1.msra.mxu0 0.0
        %776 = vmatprep.subr.mxu0 0.0
        %777 = vmatpush1.msra.mxu0 0.0
        %778 = vmatprep.subr.mxu0 0.0
        %779 = vmatpush1.msra.mxu0 0.0
        %780 = vmatprep.subr.mxu0 0.0
        %781 = vmatpush1.msra.mxu0 0.0
        %782 = vmatprep.subr.mxu0 0.0
        %783 = vmatpush1.msra.mxu0 0.0
        %784 = vmatprep.subr.mxu0 0.0
        %785 = vmatpush1.msra.mxu0 0.0
        %786 = vmatprep.subr.mxu0 0.0
        %787 = vmatpush1.msra.mxu0 0.0
        %788 = vmatprep.subr.mxu0 0.0
        %789 = vmatpush1.msra.mxu0 0.0
        %790 = vmatprep.subr.mxu0 0.0
        %791 = vmatpush1.msra.mxu0 0.0
        %792 = vmatprep.subr.mxu0 0.0
        %793 = vmatpush1.msra.mxu0 0.0
        %794 = vmatprep.subr.mxu0 0.0
        %795 = vmatpush1.msra.mxu0 0.0
        %796 = vmatprep.subr.mxu0 0.0
        %797 = vmatpush1.msra.mxu0 0.0
        %798 = vmatprep.subr.mxu0 0.0
        %799 = vmatpush1.msra.mxu0 %v766
        %800 = vmatprep.subr.mxu0 0.0
        %801 = vmatpush2.msra.mxu0 0.0
        %802 = vmatprep.subr.mxu0 0.0
        %803 = vmatpush2.msra.mxu0 0.0
        %804 = vmatprep.subr.mxu0 0.0
        %805 = vmatpush2.msra.mxu0 0.0
        %806 = vmatprep.subr.mxu0 0.0
        %807 = vmatpush2.msra.mxu0 0.0
        %808 = vmatprep.subr.mxu0 0.0
        %809 = vmatpush2.msra.mxu0 0.0
        %810 = vmatprep.subr.mxu0 0.0
        %811 = vmatpush2.msra.mxu0 0.0
        %812 = vmatprep.subr.mxu0 0.0
        %813 = vmatpush2.msra.mxu0 0.0
        %814 = vmatprep.subr.mxu0 0.0
        %815 = vmatpush2.msra.mxu0 0.0
        %816 = vmatprep.subr.mxu0 0.0
        %817 = vmatpush2.msra.mxu0 0.0
        %818 = vmatprep.subr.mxu0 0.0
        %819 = vmatpush2.msra.mxu0 0.0
        %820 = vmatprep.subr.mxu0 0.0
        %821 = vmatpush2.msra.mxu0 0.0
        %822 = vmatprep.subr.mxu0 0.0
        %823 = vmatpush2.msra.mxu0 0.0
        %824 = vmatprep.subr.mxu0 0.0
        %825 = vmatpush2.msra.mxu0 0.0
        %826 = vmatprep.subr.mxu0 0.0
        %827 = vmatpush2.msra.mxu0 0.0
        %828 = vmatprep.subr.mxu0 0.0
        %829 = vmatpush2.msra.mxu0 0.0
        %830 = vmatprep.subr.mxu0 0.0
        %831 = vmatpush2.msra.mxu0 0.0
        %832 = vmatprep.mubr.f32.mxu0 0.0
        %833 = vmatmul.mubr.f32.gmra.mxu0 %v739
        %v834 = vpop.f32.mrf.mxu0
        %v835 = vadd.f32 0.0, %v834
        %v836 = vpop.f32.mrf.mxu0
        %837 = vmatprep.mubr.f32.mxu0 0.0
        %838 = vmatmul.mubr.f32.gmra.mxu0 %v742
        %v839 = vpop.f32.mrf.mxu0
        %v840 = vadd.f32 0.0, %v839
        %v841 = vpop.f32.mrf.mxu0
        %842 = vmatprep.mubr.f32.mxu0 0.0
        %843 = vmatmul.mubr.f32.gmra.mxu0 %v745
        %v844 = vpop.f32.mrf.mxu0
        %v845 = vadd.f32 0.0, %v844
        %v846 = vpop.f32.mrf.mxu0
        %847 = vmatprep.mubr.f32.mxu0 0.0
        %848 = vmatmul.mubr.f32.gmra.mxu0 %v748
        %v849 = vpop.f32.mrf.mxu0
        %v850 = vadd.f32 0.0, %v849
        %v851 = vpop.f32.mrf.mxu0
        %852 = vmatprep.mubr.f32.mxu0 0.0
        %853 = vmatmul.mubr.f32.gmra.mxu0 %v751
        %v854 = vpop.f32.mrf.mxu0
        %v855 = vadd.f32 0.0, %v854
        %v856 = vpop.f32.mrf.mxu0
        %857 = vmatprep.mubr.f32.mxu0 0.0
        %858 = vmatmul.mubr.f32.gmra.mxu0 %v754
        %v859 = vpop.f32.mrf.mxu0
        %v860 = vadd.f32 0.0, %v859
        %v861 = vpop.f32.mrf.mxu0
        %862 = vmatprep.mubr.f32.mxu0 0.0
        %863 = vmatmul.mubr.f32.gmra.mxu0 %v757
        %v864 = vpop.f32.mrf.mxu0
        %v865 = vadd.f32 0.0, %v864
        %v866 = vpop.f32.mrf.mxu0
        %867 = vmatprep.mubr.f32.mxu0 0.0
        %868 = vmatmul.mubr.f32.gmra.mxu0 %v760
        %v869 = vpop.f32.mrf.mxu0
        %v870 = vadd.f32 0.0, %v869
        %v871 = vpop.f32.mrf.mxu0
        %872 = vmatprep.mubr.f32.mxu0 0.0
        %873 = vmatmul.mubr.f32.gmra.mxu0 %v763
        %v874 = vpop.f32.mrf.mxu0
        %v875 = vadd.f32 0.0, %v874
        %v876 = vpop.f32.mrf.mxu0
        %877 = vdwg.mxu0
        %v878 = vadd.f32 %v716, %v835
        %v879 = vadd.f32 %v717, %v840
        %v880 = vadd.f32 %v718, %v845
        %v881 = vadd.f32 %v719, %v850
        %v882 = vadd.f32 %v720, %v855
        %v883 = vadd.f32 %v721, %v860
        %v884 = vadd.f32 %v722, %v865
        %v885 = vadd.f32 %v723, %v870
        %v886 = vadd.f32 %v724, %v875
        %s887 = sadd.s32 %s256, 19
        %s888 = scalar_lea.vmem %s251, %s887
        %v889 = vld [vmem:[%s888] sm:$0xff]
        %v890 = vld [vmem:[%s888 + $0x8] sm:$0xff]
        %v891 = vld [vmem:[%s888 + $0x10] sm:$0xff]
        %v892 = vld [vmem:[%s888 + $0x18] sm:$0xff]
        %v893 = vld [vmem:[%s888 + $0x20] sm:$0xff]
        %v894 = vld [vmem:[%s888 + $0x28] sm:$0xff]
        %v895 = vld [vmem:[%s888 + $0x30] sm:$0xff]
        %v896 = vld [vmem:[%s888 + $0x38] sm:$0xff]
        %v897 = vld [vmem:[%s888 + $0x40] sm:$0xff]
        %s898 = scalar_lea.vmem %s1, 16
        %v899 = vld [vmem:[%s898] sm:$0xf]
        %v901 = vsel %vm281, %v889, 0
        %v904 = vsel %vm281, %v890, 0
        %v907 = vsel %vm281, %v891, 0
        %v910 = vsel %vm281, %v892, 0
        %v913 = vsel %vm281, %v893, 0
        %v916 = vsel %vm281, %v894, 0
        %v919 = vsel %vm281, %v895, 0
        %v922 = vsel %vm281, %v896, 0
        %v925 = vsel %vm281, %v897, 0
        %v928 = vsel %vm309, %v899, 0
        %930 = vmatprep.subr.mxu0 0.0
        %931 = vmatpush1.msra.mxu0 0.0
        %932 = vmatprep.subr.mxu0 0.0
        %933 = vmatpush1.msra.mxu0 0.0
        %934 = vmatprep.subr.mxu0 0.0
        %935 = vmatpush1.msra.mxu0 0.0
        %936 = vmatprep.subr.mxu0 0.0
        %937 = vmatpush1.msra.mxu0 0.0
        %938 = vmatprep.subr.mxu0 0.0
        %939 = vmatpush1.msra.mxu0 0.0
        %940 = vmatprep.subr.mxu0 0.0
        %941 = vmatpush1.msra.mxu0 0.0
        %942 = vmatprep.subr.mxu0 0.0
        %943 = vmatpush1.msra.mxu0 0.0
        %944 = vmatprep.subr.mxu0 0.0
        %945 = vmatpush1.msra.mxu0 0.0
        %946 = vmatprep.subr.mxu0 0.0
        %947 = vmatpush1.msra.mxu0 0.0
        %948 = vmatprep.subr.mxu0 0.0
        %949 = vmatpush1.msra.mxu0 0.0
        %950 = vmatprep.subr.mxu0 0.0
        %951 = vmatpush1.msra.mxu0 0.0
        %952 = vmatprep.subr.mxu0 0.0
        %953 = vmatpush1.msra.mxu0 0.0
        %954 = vmatprep.subr.mxu0 0.0
        %955 = vmatpush1.msra.mxu0 0.0
        %956 = vmatprep.subr.mxu0 0.0
        %957 = vmatpush1.msra.mxu0 0.0
        %958 = vmatprep.subr.mxu0 0.0
        %959 = vmatpush1.msra.mxu0 0.0
        %960 = vmatprep.subr.mxu0 0.0
        %961 = vmatpush1.msra.mxu0 %v928
        %962 = vmatprep.subr.mxu0 0.0
        %963 = vmatpush2.msra.mxu0 0.0
        %964 = vmatprep.subr.mxu0 0.0
        %965 = vmatpush2.msra.mxu0 0.0
        %966 = vmatprep.subr.mxu0 0.0
        %967 = vmatpush2.msra.mxu0 0.0
        %968 = vmatprep.subr.mxu0 0.0
        %969 = vmatpush2.msra.mxu0 0.0
        %970 = vmatprep.subr.mxu0 0.0
        %971 = vmatpush2.msra.mxu0 0.0
        %972 = vmatprep.subr.mxu0 0.0
        %973 = vmatpush2.msra.mxu0 0.0
        %974 = vmatprep.subr.mxu0 0.0
        %975 = vmatpush2.msra.mxu0 0.0
        %976 = vmatprep.subr.mxu0 0.0
        %977 = vmatpush2.msra.mxu0 0.0
        %978 = vmatprep.subr.mxu0 0.0
        %979 = vmatpush2.msra.mxu0 0.0
        %980 = vmatprep.subr.mxu0 0.0
        %981 = vmatpush2.msra.mxu0 0.0
        %982 = vmatprep.subr.mxu0 0.0
        %983 = vmatpush2.msra.mxu0 0.0
        %984 = vmatprep.subr.mxu0 0.0
        %985 = vmatpush2.msra.mxu0 0.0
        %986 = vmatprep.subr.mxu0 0.0
        %987 = vmatpush2.msra.mxu0 0.0
        %988 = vmatprep.subr.mxu0 0.0
        %989 = vmatpush2.msra.mxu0 0.0
        %990 = vmatprep.subr.mxu0 0.0
        %991 = vmatpush2.msra.mxu0 0.0
        %992 = vmatprep.subr.mxu0 0.0
        %993 = vmatpush2.msra.mxu0 0.0
        %994 = vmatprep.mubr.f32.mxu0 0.0
        %995 = vmatmul.mubr.f32.gmra.mxu0 %v901
        %v996 = vpop.f32.mrf.mxu0
        %v997 = vadd.f32 0.0, %v996
        %v998 = vpop.f32.mrf.mxu0
        %999 = vmatprep.mubr.f32.mxu0 0.0
        %1000 = vmatmul.mubr.f32.gmra.mxu0 %v904
        %v1001 = vpop.f32.mrf.mxu0
        %v1002 = vadd.f32 0.0, %v1001
        %v1003 = vpop.f32.mrf.mxu0
        %1004 = vmatprep.mubr.f32.mxu0 0.0
        %1005 = vmatmul.mubr.f32.gmra.mxu0 %v907
        %v1006 = vpop.f32.mrf.mxu0
        %v1007 = vadd.f32 0.0, %v1006
        %v1008 = vpop.f32.mrf.mxu0
        %1009 = vmatprep.mubr.f32.mxu0 0.0
        %1010 = vmatmul.mubr.f32.gmra.mxu0 %v910
        %v1011 = vpop.f32.mrf.mxu0
        %v1012 = vadd.f32 0.0, %v1011
        %v1013 = vpop.f32.mrf.mxu0
        %1014 = vmatprep.mubr.f32.mxu0 0.0
        %1015 = vmatmul.mubr.f32.gmra.mxu0 %v913
        %v1016 = vpop.f32.mrf.mxu0
        %v1017 = vadd.f32 0.0, %v1016
        %v1018 = vpop.f32.mrf.mxu0
        %1019 = vmatprep.mubr.f32.mxu0 0.0
        %1020 = vmatmul.mubr.f32.gmra.mxu0 %v916
        %v1021 = vpop.f32.mrf.mxu0
        %v1022 = vadd.f32 0.0, %v1021
        %v1023 = vpop.f32.mrf.mxu0
        %1024 = vmatprep.mubr.f32.mxu0 0.0
        %1025 = vmatmul.mubr.f32.gmra.mxu0 %v919
        %v1026 = vpop.f32.mrf.mxu0
        %v1027 = vadd.f32 0.0, %v1026
        %v1028 = vpop.f32.mrf.mxu0
        %1029 = vmatprep.mubr.f32.mxu0 0.0
        %1030 = vmatmul.mubr.f32.gmra.mxu0 %v922
        %v1031 = vpop.f32.mrf.mxu0
        %v1032 = vadd.f32 0.0, %v1031
        %v1033 = vpop.f32.mrf.mxu0
        %1034 = vmatprep.mubr.f32.mxu0 0.0
        %1035 = vmatmul.mubr.f32.gmra.mxu0 %v925
        %v1036 = vpop.f32.mrf.mxu0
        %v1037 = vadd.f32 0.0, %v1036
        %v1038 = vpop.f32.mrf.mxu0
        %1039 = vdwg.mxu0
        %v1040 = vadd.f32 %v878, %v997
        %v1041 = vadd.f32 %v879, %v1002
        %v1042 = vadd.f32 %v880, %v1007
        %v1043 = vadd.f32 %v881, %v1012
        %v1044 = vadd.f32 %v882, %v1017
        %v1045 = vadd.f32 %v883, %v1022
        %v1046 = vadd.f32 %v884, %v1027
        %v1047 = vadd.f32 %v885, %v1032
        %v1048 = vadd.f32 %v886, %v1037
        %s1049 = sadd.s32 %s256, 20
        %s1050 = scalar_lea.vmem %s251, %s1049
        %v1051 = vld [vmem:[%s1050] sm:$0xff]
        %v1052 = vld [vmem:[%s1050 + $0x8] sm:$0xff]
        %v1053 = vld [vmem:[%s1050 + $0x10] sm:$0xff]
        %v1054 = vld [vmem:[%s1050 + $0x18] sm:$0xff]
        %v1055 = vld [vmem:[%s1050 + $0x20] sm:$0xff]
        %v1056 = vld [vmem:[%s1050 + $0x28] sm:$0xff]
        %v1057 = vld [vmem:[%s1050 + $0x30] sm:$0xff]
        %v1058 = vld [vmem:[%s1050 + $0x38] sm:$0xff]
        %v1059 = vld [vmem:[%s1050 + $0x40] sm:$0xff]
        %s1060 = scalar_lea.vmem %s1, 20
        %v1061 = vld [vmem:[%s1060] sm:$0xf]
        %v1063 = vsel %vm281, %v1051, 0
        %v1066 = vsel %vm281, %v1052, 0
        %v1069 = vsel %vm281, %v1053, 0
        %v1072 = vsel %vm281, %v1054, 0
        %v1075 = vsel %vm281, %v1055, 0
        %v1078 = vsel %vm281, %v1056, 0
        %v1081 = vsel %vm281, %v1057, 0
        %v1084 = vsel %vm281, %v1058, 0
        %v1087 = vsel %vm281, %v1059, 0
        %v1090 = vsel %vm309, %v1061, 0
        %1092 = vmatprep.subr.mxu0 0.0
        %1093 = vmatpush1.msra.mxu0 0.0
        %1094 = vmatprep.subr.mxu0 0.0
        %1095 = vmatpush1.msra.mxu0 0.0
        %1096 = vmatprep.subr.mxu0 0.0
        %1097 = vmatpush1.msra.mxu0 0.0
        %1098 = vmatprep.subr.mxu0 0.0
        %1099 = vmatpush1.msra.mxu0 0.0
        %1100 = vmatprep.subr.mxu0 0.0
        %1101 = vmatpush1.msra.mxu0 0.0
        %1102 = vmatprep.subr.mxu0 0.0
        %1103 = vmatpush1.msra.mxu0 0.0
        %1104 = vmatprep.subr.mxu0 0.0
        %1105 = vmatpush1.msra.mxu0 0.0
        %1106 = vmatprep.subr.mxu0 0.0
        %1107 = vmatpush1.msra.mxu0 0.0
        %1108 = vmatprep.subr.mxu0 0.0
        %1109 = vmatpush1.msra.mxu0 0.0
        %1110 = vmatprep.subr.mxu0 0.0
        %1111 = vmatpush1.msra.mxu0 0.0
        %1112 = vmatprep.subr.mxu0 0.0
        %1113 = vmatpush1.msra.mxu0 0.0
        %1114 = vmatprep.subr.mxu0 0.0
        %1115 = vmatpush1.msra.mxu0 0.0
        %1116 = vmatprep.subr.mxu0 0.0
        %1117 = vmatpush1.msra.mxu0 0.0
        %1118 = vmatprep.subr.mxu0 0.0
        %1119 = vmatpush1.msra.mxu0 0.0
        %1120 = vmatprep.subr.mxu0 0.0
        %1121 = vmatpush1.msra.mxu0 0.0
        %1122 = vmatprep.subr.mxu0 0.0
        %1123 = vmatpush1.msra.mxu0 %v1090
        %1124 = vmatprep.subr.mxu0 0.0
        %1125 = vmatpush2.msra.mxu0 0.0
        %1126 = vmatprep.subr.mxu0 0.0
        %1127 = vmatpush2.msra.mxu0 0.0
        %1128 = vmatprep.subr.mxu0 0.0
        %1129 = vmatpush2.msra.mxu0 0.0
        %1130 = vmatprep.subr.mxu0 0.0
        %1131 = vmatpush2.msra.mxu0 0.0
        %1132 = vmatprep.subr.mxu0 0.0
        %1133 = vmatpush2.msra.mxu0 0.0
        %1134 = vmatprep.subr.mxu0 0.0
        %1135 = vmatpush2.msra.mxu0 0.0
        %1136 = vmatprep.subr.mxu0 0.0
        %1137 = vmatpush2.msra.mxu0 0.0
        %1138 = vmatprep.subr.mxu0 0.0
        %1139 = vmatpush2.msra.mxu0 0.0
        %1140 = vmatprep.subr.mxu0 0.0
        %1141 = vmatpush2.msra.mxu0 0.0
        %1142 = vmatprep.subr.mxu0 0.0
        %1143 = vmatpush2.msra.mxu0 0.0
        %1144 = vmatprep.subr.mxu0 0.0
        %1145 = vmatpush2.msra.mxu0 0.0
        %1146 = vmatprep.subr.mxu0 0.0
        %1147 = vmatpush2.msra.mxu0 0.0
        %1148 = vmatprep.subr.mxu0 0.0
        %1149 = vmatpush2.msra.mxu0 0.0
        %1150 = vmatprep.subr.mxu0 0.0
        %1151 = vmatpush2.msra.mxu0 0.0
        %1152 = vmatprep.subr.mxu0 0.0
        %1153 = vmatpush2.msra.mxu0 0.0
        %1154 = vmatprep.subr.mxu0 0.0
        %1155 = vmatpush2.msra.mxu0 0.0
        %1156 = vmatprep.mubr.f32.mxu0 0.0
        %1157 = vmatmul.mubr.f32.gmra.mxu0 %v1063
        %v1158 = vpop.f32.mrf.mxu0
        %v1159 = vadd.f32 0.0, %v1158
        %v1160 = vpop.f32.mrf.mxu0
        %1161 = vmatprep.mubr.f32.mxu0 0.0
        %1162 = vmatmul.mubr.f32.gmra.mxu0 %v1066
        %v1163 = vpop.f32.mrf.mxu0
        %v1164 = vadd.f32 0.0, %v1163
        %v1165 = vpop.f32.mrf.mxu0
        %1166 = vmatprep.mubr.f32.mxu0 0.0
        %1167 = vmatmul.mubr.f32.gmra.mxu0 %v1069
        %v1168 = vpop.f32.mrf.mxu0
        %v1169 = vadd.f32 0.0, %v1168
        %v1170 = vpop.f32.mrf.mxu0
        %1171 = vmatprep.mubr.f32.mxu0 0.0
        %1172 = vmatmul.mubr.f32.gmra.mxu0 %v1072
        %v1173 = vpop.f32.mrf.mxu0
        %v1174 = vadd.f32 0.0, %v1173
        %v1175 = vpop.f32.mrf.mxu0
        %1176 = vmatprep.mubr.f32.mxu0 0.0
        %1177 = vmatmul.mubr.f32.gmra.mxu0 %v1075
        %v1178 = vpop.f32.mrf.mxu0
        %v1179 = vadd.f32 0.0, %v1178
        %v1180 = vpop.f32.mrf.mxu0
        %1181 = vmatprep.mubr.f32.mxu0 0.0
        %1182 = vmatmul.mubr.f32.gmra.mxu0 %v1078
        %v1183 = vpop.f32.mrf.mxu0
        %v1184 = vadd.f32 0.0, %v1183
        %v1185 = vpop.f32.mrf.mxu0
        %1186 = vmatprep.mubr.f32.mxu0 0.0
        %1187 = vmatmul.mubr.f32.gmra.mxu0 %v1081
        %v1188 = vpop.f32.mrf.mxu0
        %v1189 = vadd.f32 0.0, %v1188
        %v1190 = vpop.f32.mrf.mxu0
        %1191 = vmatprep.mubr.f32.mxu0 0.0
        %1192 = vmatmul.mubr.f32.gmra.mxu0 %v1084
        %v1193 = vpop.f32.mrf.mxu0
        %v1194 = vadd.f32 0.0, %v1193
        %v1195 = vpop.f32.mrf.mxu0
        %1196 = vmatprep.mubr.f32.mxu0 0.0
        %1197 = vmatmul.mubr.f32.gmra.mxu0 %v1087
        %v1198 = vpop.f32.mrf.mxu0
        %v1199 = vadd.f32 0.0, %v1198
        %v1200 = vpop.f32.mrf.mxu0
        %1201 = vdwg.mxu0
        %v1202 = vadd.f32 %v1040, %v1159
        %v1203 = vadd.f32 %v1041, %v1164
        %v1204 = vadd.f32 %v1042, %v1169
        %v1205 = vadd.f32 %v1043, %v1174
        %v1206 = vadd.f32 %v1044, %v1179
        %v1207 = vadd.f32 %v1045, %v1184
        %v1208 = vadd.f32 %v1046, %v1189
        %v1209 = vadd.f32 %v1047, %v1194
        %v1210 = vadd.f32 %v1048, %v1199
        %s1211 = sadd.s32 %s256, 36
        %s1212 = scalar_lea.vmem %s251, %s1211
        %v1213 = vld [vmem:[%s1212] sm:$0xff]
        %v1214 = vld [vmem:[%s1212 + $0x8] sm:$0xff]
        %v1215 = vld [vmem:[%s1212 + $0x10] sm:$0xff]
        %v1216 = vld [vmem:[%s1212 + $0x18] sm:$0xff]
        %v1217 = vld [vmem:[%s1212 + $0x20] sm:$0xff]
        %v1218 = vld [vmem:[%s1212 + $0x28] sm:$0xff]
        %v1219 = vld [vmem:[%s1212 + $0x30] sm:$0xff]
        %v1220 = vld [vmem:[%s1212 + $0x38] sm:$0xff]
        %v1221 = vld [vmem:[%s1212 + $0x40] sm:$0xff]
        %s1222 = scalar_lea.vmem %s1, 24
        %v1223 = vld [vmem:[%s1222] sm:$0xf]
        %v1225 = vsel %vm281, %v1213, 0
        %v1228 = vsel %vm281, %v1214, 0
        %v1231 = vsel %vm281, %v1215, 0
        %v1234 = vsel %vm281, %v1216, 0
        %v1237 = vsel %vm281, %v1217, 0
        %v1240 = vsel %vm281, %v1218, 0
        %v1243 = vsel %vm281, %v1219, 0
        %v1246 = vsel %vm281, %v1220, 0
        %v1249 = vsel %vm281, %v1221, 0
        %v1252 = vsel %vm309, %v1223, 0
        %1254 = vmatprep.subr.mxu0 0.0
        %1255 = vmatpush1.msra.mxu0 0.0
        %1256 = vmatprep.subr.mxu0 0.0
        %1257 = vmatpush1.msra.mxu0 0.0
        %1258 = vmatprep.subr.mxu0 0.0
        %1259 = vmatpush1.msra.mxu0 0.0
        %1260 = vmatprep.subr.mxu0 0.0
        %1261 = vmatpush1.msra.mxu0 0.0
        %1262 = vmatprep.subr.mxu0 0.0
        %1263 = vmatpush1.msra.mxu0 0.0
        %1264 = vmatprep.subr.mxu0 0.0
        %1265 = vmatpush1.msra.mxu0 0.0
        %1266 = vmatprep.subr.mxu0 0.0
        %1267 = vmatpush1.msra.mxu0 0.0
        %1268 = vmatprep.subr.mxu0 0.0
        %1269 = vmatpush1.msra.mxu0 0.0
        %1270 = vmatprep.subr.mxu0 0.0
        %1271 = vmatpush1.msra.mxu0 0.0
        %1272 = vmatprep.subr.mxu0 0.0
        %1273 = vmatpush1.msra.mxu0 0.0
        %1274 = vmatprep.subr.mxu0 0.0
        %1275 = vmatpush1.msra.mxu0 0.0
        %1276 = vmatprep.subr.mxu0 0.0
        %1277 = vmatpush1.msra.mxu0 0.0
        %1278 = vmatprep.subr.mxu0 0.0
        %1279 = vmatpush1.msra.mxu0 0.0
        %1280 = vmatprep.subr.mxu0 0.0
        %1281 = vmatpush1.msra.mxu0 0.0
        %1282 = vmatprep.subr.mxu0 0.0
        %1283 = vmatpush1.msra.mxu0 0.0
        %1284 = vmatprep.subr.mxu0 0.0
        %1285 = vmatpush1.msra.mxu0 %v1252
        %1286 = vmatprep.subr.mxu0 0.0
        %1287 = vmatpush2.msra.mxu0 0.0
        %1288 = vmatprep.subr.mxu0 0.0
        %1289 = vmatpush2.msra.mxu0 0.0
        %1290 = vmatprep.subr.mxu0 0.0
        %1291 = vmatpush2.msra.mxu0 0.0
        %1292 = vmatprep.subr.mxu0 0.0
        %1293 = vmatpush2.msra.mxu0 0.0
        %1294 = vmatprep.subr.mxu0 0.0
        %1295 = vmatpush2.msra.mxu0 0.0
        %1296 = vmatprep.subr.mxu0 0.0
        %1297 = vmatpush2.msra.mxu0 0.0
        %1298 = vmatprep.subr.mxu0 0.0
        %1299 = vmatpush2.msra.mxu0 0.0
        %1300 = vmatprep.subr.mxu0 0.0
        %1301 = vmatpush2.msra.mxu0 0.0
        %1302 = vmatprep.subr.mxu0 0.0
        %1303 = vmatpush2.msra.mxu0 0.0
        %1304 = vmatprep.subr.mxu0 0.0
        %1305 = vmatpush2.msra.mxu0 0.0
        %1306 = vmatprep.subr.mxu0 0.0
        %1307 = vmatpush2.msra.mxu0 0.0
        %1308 = vmatprep.subr.mxu0 0.0
        %1309 = vmatpush2.msra.mxu0 0.0
        %1310 = vmatprep.subr.mxu0 0.0
        %1311 = vmatpush2.msra.mxu0 0.0
        %1312 = vmatprep.subr.mxu0 0.0
        %1313 = vmatpush2.msra.mxu0 0.0
        %1314 = vmatprep.subr.mxu0 0.0
        %1315 = vmatpush2.msra.mxu0 0.0
        %1316 = vmatprep.subr.mxu0 0.0
        %1317 = vmatpush2.msra.mxu0 0.0
        %1318 = vmatprep.mubr.f32.mxu0 0.0
        %1319 = vmatmul.mubr.f32.gmra.mxu0 %v1225
        %v1320 = vpop.f32.mrf.mxu0
        %v1321 = vadd.f32 0.0, %v1320
        %v1322 = vpop.f32.mrf.mxu0
        %1323 = vmatprep.mubr.f32.mxu0 0.0
        %1324 = vmatmul.mubr.f32.gmra.mxu0 %v1228
        %v1325 = vpop.f32.mrf.mxu0
        %v1326 = vadd.f32 0.0, %v1325
        %v1327 = vpop.f32.mrf.mxu0
        %1328 = vmatprep.mubr.f32.mxu0 0.0
        %1329 = vmatmul.mubr.f32.gmra.mxu0 %v1231
        %v1330 = vpop.f32.mrf.mxu0
        %v1331 = vadd.f32 0.0, %v1330
        %v1332 = vpop.f32.mrf.mxu0
        %1333 = vmatprep.mubr.f32.mxu0 0.0
        %1334 = vmatmul.mubr.f32.gmra.mxu0 %v1234
        %v1335 = vpop.f32.mrf.mxu0
        %v1336 = vadd.f32 0.0, %v1335
        %v1337 = vpop.f32.mrf.mxu0
        %1338 = vmatprep.mubr.f32.mxu0 0.0
        %1339 = vmatmul.mubr.f32.gmra.mxu0 %v1237
        %v1340 = vpop.f32.mrf.mxu0
        %v1341 = vadd.f32 0.0, %v1340
        %v1342 = vpop.f32.mrf.mxu0
        %1343 = vmatprep.mubr.f32.mxu0 0.0
        %1344 = vmatmul.mubr.f32.gmra.mxu0 %v1240
        %v1345 = vpop.f32.mrf.mxu0
        %v1346 = vadd.f32 0.0, %v1345
        %v1347 = vpop.f32.mrf.mxu0
        %1348 = vmatprep.mubr.f32.mxu0 0.0
        %1349 = vmatmul.mubr.f32.gmra.mxu0 %v1243
        %v1350 = vpop.f32.mrf.mxu0
        %v1351 = vadd.f32 0.0, %v1350
        %v1352 = vpop.f32.mrf.mxu0
        %1353 = vmatprep.mubr.f32.mxu0 0.0
        %1354 = vmatmul.mubr.f32.gmra.mxu0 %v1246
        %v1355 = vpop.f32.mrf.mxu0
        %v1356 = vadd.f32 0.0, %v1355
        %v1357 = vpop.f32.mrf.mxu0
        %1358 = vmatprep.mubr.f32.mxu0 0.0
        %1359 = vmatmul.mubr.f32.gmra.mxu0 %v1249
        %v1360 = vpop.f32.mrf.mxu0
        %v1361 = vadd.f32 0.0, %v1360
        %v1362 = vpop.f32.mrf.mxu0
        %1363 = vdwg.mxu0
        %v1364 = vadd.f32 %v1202, %v1321
        %v1365 = vadd.f32 %v1203, %v1326
        %v1366 = vadd.f32 %v1204, %v1331
        %v1367 = vadd.f32 %v1205, %v1336
        %v1368 = vadd.f32 %v1206, %v1341
        %v1369 = vadd.f32 %v1207, %v1346
        %v1370 = vadd.f32 %v1208, %v1351
        %v1371 = vadd.f32 %v1209, %v1356
        %v1372 = vadd.f32 %v1210, %v1361
        %s1373 = sadd.s32 %s256, 37
        %s1374 = scalar_lea.vmem %s251, %s1373
        %v1375 = vld [vmem:[%s1374] sm:$0xff]
        %v1376 = vld [vmem:[%s1374 + $0x8] sm:$0xff]
        %v1377 = vld [vmem:[%s1374 + $0x10] sm:$0xff]
        %v1378 = vld [vmem:[%s1374 + $0x18] sm:$0xff]
        %v1379 = vld [vmem:[%s1374 + $0x20] sm:$0xff]
        %v1380 = vld [vmem:[%s1374 + $0x28] sm:$0xff]
        %v1381 = vld [vmem:[%s1374 + $0x30] sm:$0xff]
        %v1382 = vld [vmem:[%s1374 + $0x38] sm:$0xff]
        %v1383 = vld [vmem:[%s1374 + $0x40] sm:$0xff]
        %s1384 = scalar_lea.vmem %s1, 28
        %v1385 = vld [vmem:[%s1384] sm:$0xf]
        %v1387 = vsel %vm281, %v1375, 0
        %v1390 = vsel %vm281, %v1376, 0
        %v1393 = vsel %vm281, %v1377, 0
        %v1396 = vsel %vm281, %v1378, 0
        %v1399 = vsel %vm281, %v1379, 0
        %v1402 = vsel %vm281, %v1380, 0
        %v1405 = vsel %vm281, %v1381, 0
        %v1408 = vsel %vm281, %v1382, 0
        %v1411 = vsel %vm281, %v1383, 0
        %v1414 = vsel %vm309, %v1385, 0
        %1416 = vmatprep.subr.mxu0 0.0
        %1417 = vmatpush1.msra.mxu0 0.0
        %1418 = vmatprep.subr.mxu0 0.0
        %1419 = vmatpush1.msra.mxu0 0.0
        %1420 = vmatprep.subr.mxu0 0.0
        %1421 = vmatpush1.msra.mxu0 0.0
        %1422 = vmatprep.subr.mxu0 0.0
        %1423 = vmatpush1.msra.mxu0 0.0
        %1424 = vmatprep.subr.mxu0 0.0
        %1425 = vmatpush1.msra.mxu0 0.0
        %1426 = vmatprep.subr.mxu0 0.0
        %1427 = vmatpush1.msra.mxu0 0.0
        %1428 = vmatprep.subr.mxu0 0.0
        %1429 = vmatpush1.msra.mxu0 0.0
        %1430 = vmatprep.subr.mxu0 0.0
        %1431 = vmatpush1.msra.mxu0 0.0
        %1432 = vmatprep.subr.mxu0 0.0
        %1433 = vmatpush1.msra.mxu0 0.0
        %1434 = vmatprep.subr.mxu0 0.0
        %1435 = vmatpush1.msra.mxu0 0.0
        %1436 = vmatprep.subr.mxu0 0.0
        %1437 = vmatpush1.msra.mxu0 0.0
        %1438 = vmatprep.subr.mxu0 0.0
        %1439 = vmatpush1.msra.mxu0 0.0
        %1440 = vmatprep.subr.mxu0 0.0
        %1441 = vmatpush1.msra.mxu0 0.0
        %1442 = vmatprep.subr.mxu0 0.0
        %1443 = vmatpush1.msra.mxu0 0.0
        %1444 = vmatprep.subr.mxu0 0.0
        %1445 = vmatpush1.msra.mxu0 0.0
        %1446 = vmatprep.subr.mxu0 0.0
        %1447 = vmatpush1.msra.mxu0 %v1414
        %1448 = vmatprep.subr.mxu0 0.0
        %1449 = vmatpush2.msra.mxu0 0.0
        %1450 = vmatprep.subr.mxu0 0.0
        %1451 = vmatpush2.msra.mxu0 0.0
        %1452 = vmatprep.subr.mxu0 0.0
        %1453 = vmatpush2.msra.mxu0 0.0
        %1454 = vmatprep.subr.mxu0 0.0
        %1455 = vmatpush2.msra.mxu0 0.0
        %1456 = vmatprep.subr.mxu0 0.0
        %1457 = vmatpush2.msra.mxu0 0.0
        %1458 = vmatprep.subr.mxu0 0.0
        %1459 = vmatpush2.msra.mxu0 0.0
        %1460 = vmatprep.subr.mxu0 0.0
        %1461 = vmatpush2.msra.mxu0 0.0
        %1462 = vmatprep.subr.mxu0 0.0
        %1463 = vmatpush2.msra.mxu0 0.0
        %1464 = vmatprep.subr.mxu0 0.0
        %1465 = vmatpush2.msra.mxu0 0.0
        %1466 = vmatprep.subr.mxu0 0.0
        %1467 = vmatpush2.msra.mxu0 0.0
        %1468 = vmatprep.subr.mxu0 0.0
        %1469 = vmatpush2.msra.mxu0 0.0
        %1470 = vmatprep.subr.mxu0 0.0
        %1471 = vmatpush2.msra.mxu0 0.0
        %1472 = vmatprep.subr.mxu0 0.0
        %1473 = vmatpush2.msra.mxu0 0.0
        %1474 = vmatprep.subr.mxu0 0.0
        %1475 = vmatpush2.msra.mxu0 0.0
        %1476 = vmatprep.subr.mxu0 0.0
        %1477 = vmatpush2.msra.mxu0 0.0
        %1478 = vmatprep.subr.mxu0 0.0
        %1479 = vmatpush2.msra.mxu0 0.0
        %1480 = vmatprep.mubr.f32.mxu0 0.0
        %1481 = vmatmul.mubr.f32.gmra.mxu0 %v1387
        %v1482 = vpop.f32.mrf.mxu0
        %v1483 = vadd.f32 0.0, %v1482
        %v1484 = vpop.f32.mrf.mxu0
        %1485 = vmatprep.mubr.f32.mxu0 0.0
        %1486 = vmatmul.mubr.f32.gmra.mxu0 %v1390
        %v1487 = vpop.f32.mrf.mxu0
        %v1488 = vadd.f32 0.0, %v1487
        %v1489 = vpop.f32.mrf.mxu0
        %1490 = vmatprep.mubr.f32.mxu0 0.0
        %1491 = vmatmul.mubr.f32.gmra.mxu0 %v1393
        %v1492 = vpop.f32.mrf.mxu0
        %v1493 = vadd.f32 0.0, %v1492
        %v1494 = vpop.f32.mrf.mxu0
        %1495 = vmatprep.mubr.f32.mxu0 0.0
        %1496 = vmatmul.mubr.f32.gmra.mxu0 %v1396
        %v1497 = vpop.f32.mrf.mxu0
        %v1498 = vadd.f32 0.0, %v1497
        %v1499 = vpop.f32.mrf.mxu0
        %1500 = vmatprep.mubr.f32.mxu0 0.0
        %1501 = vmatmul.mubr.f32.gmra.mxu0 %v1399
        %v1502 = vpop.f32.mrf.mxu0
        %v1503 = vadd.f32 0.0, %v1502
        %v1504 = vpop.f32.mrf.mxu0
        %1505 = vmatprep.mubr.f32.mxu0 0.0
        %1506 = vmatmul.mubr.f32.gmra.mxu0 %v1402
        %v1507 = vpop.f32.mrf.mxu0
        %v1508 = vadd.f32 0.0, %v1507
        %v1509 = vpop.f32.mrf.mxu0
        %1510 = vmatprep.mubr.f32.mxu0 0.0
        %1511 = vmatmul.mubr.f32.gmra.mxu0 %v1405
        %v1512 = vpop.f32.mrf.mxu0
        %v1513 = vadd.f32 0.0, %v1512
        %v1514 = vpop.f32.mrf.mxu0
        %1515 = vmatprep.mubr.f32.mxu0 0.0
        %1516 = vmatmul.mubr.f32.gmra.mxu0 %v1408
        %v1517 = vpop.f32.mrf.mxu0
        %v1518 = vadd.f32 0.0, %v1517
        %v1519 = vpop.f32.mrf.mxu0
        %1520 = vmatprep.mubr.f32.mxu0 0.0
        %1521 = vmatmul.mubr.f32.gmra.mxu0 %v1411
        %v1522 = vpop.f32.mrf.mxu0
        %v1523 = vadd.f32 0.0, %v1522
        %v1524 = vpop.f32.mrf.mxu0
        %1525 = vdwg.mxu0
        %v1526 = vadd.f32 %v1364, %v1483
        %v1527 = vadd.f32 %v1365, %v1488
        %v1528 = vadd.f32 %v1366, %v1493
        %v1529 = vadd.f32 %v1367, %v1498
        %v1530 = vadd.f32 %v1368, %v1503
        %v1531 = vadd.f32 %v1369, %v1508
        %v1532 = vadd.f32 %v1370, %v1513
        %v1533 = vadd.f32 %v1371, %v1518
        %v1534 = vadd.f32 %v1372, %v1523
        %s1535 = sadd.s32 %s256, 38
        %s1536 = scalar_lea.vmem %s251, %s1535
        %v1537 = vld [vmem:[%s1536] sm:$0xff]
        %v1538 = vld [vmem:[%s1536 + $0x8] sm:$0xff]
        %v1539 = vld [vmem:[%s1536 + $0x10] sm:$0xff]
        %v1540 = vld [vmem:[%s1536 + $0x18] sm:$0xff]
        %v1541 = vld [vmem:[%s1536 + $0x20] sm:$0xff]
        %v1542 = vld [vmem:[%s1536 + $0x28] sm:$0xff]
        %v1543 = vld [vmem:[%s1536 + $0x30] sm:$0xff]
        %v1544 = vld [vmem:[%s1536 + $0x38] sm:$0xff]
        %v1545 = vld [vmem:[%s1536 + $0x40] sm:$0xff]
        %s1546 = scalar_lea.vmem %s1, 32
        %v1547 = vld [vmem:[%s1546] sm:$0xf]
        %v1549 = vsel %vm281, %v1537, 0
        %v1552 = vsel %vm281, %v1538, 0
        %v1555 = vsel %vm281, %v1539, 0
        %v1558 = vsel %vm281, %v1540, 0
        %v1561 = vsel %vm281, %v1541, 0
        %v1564 = vsel %vm281, %v1542, 0
        %v1567 = vsel %vm281, %v1543, 0
        %v1570 = vsel %vm281, %v1544, 0
        %v1573 = vsel %vm281, %v1545, 0
        %v1576 = vsel %vm309, %v1547, 0
        %1578 = vmatprep.subr.mxu0 0.0
        %1579 = vmatpush1.msra.mxu0 0.0
        %1580 = vmatprep.subr.mxu0 0.0
        %1581 = vmatpush1.msra.mxu0 0.0
        %1582 = vmatprep.subr.mxu0 0.0
        %1583 = vmatpush1.msra.mxu0 0.0
        %1584 = vmatprep.subr.mxu0 0.0
        %1585 = vmatpush1.msra.mxu0 0.0
        %1586 = vmatprep.subr.mxu0 0.0
        %1587 = vmatpush1.msra.mxu0 0.0
        %1588 = vmatprep.subr.mxu0 0.0
        %1589 = vmatpush1.msra.mxu0 0.0
        %1590 = vmatprep.subr.mxu0 0.0
        %1591 = vmatpush1.msra.mxu0 0.0
        %1592 = vmatprep.subr.mxu0 0.0
        %1593 = vmatpush1.msra.mxu0 0.0
        %1594 = vmatprep.subr.mxu0 0.0
        %1595 = vmatpush1.msra.mxu0 0.0
        %1596 = vmatprep.subr.mxu0 0.0
        %1597 = vmatpush1.msra.mxu0 0.0
        %1598 = vmatprep.subr.mxu0 0.0
        %1599 = vmatpush1.msra.mxu0 0.0
        %1600 = vmatprep.subr.mxu0 0.0
        %1601 = vmatpush1.msra.mxu0 0.0
        %1602 = vmatprep.subr.mxu0 0.0
        %1603 = vmatpush1.msra.mxu0 0.0
        %1604 = vmatprep.subr.mxu0 0.0
        %1605 = vmatpush1.msra.mxu0 0.0
        %1606 = vmatprep.subr.mxu0 0.0
        %1607 = vmatpush1.msra.mxu0 0.0
        %1608 = vmatprep.subr.mxu0 0.0
        %1609 = vmatpush1.msra.mxu0 %v1576
        %1610 = vmatprep.subr.mxu0 0.0
        %1611 = vmatpush2.msra.mxu0 0.0
        %1612 = vmatprep.subr.mxu0 0.0
        %1613 = vmatpush2.msra.mxu0 0.0
        %1614 = vmatprep.subr.mxu0 0.0
        %1615 = vmatpush2.msra.mxu0 0.0
        %1616 = vmatprep.subr.mxu0 0.0
        %1617 = vmatpush2.msra.mxu0 0.0
        %1618 = vmatprep.subr.mxu0 0.0
        %1619 = vmatpush2.msra.mxu0 0.0
        %1620 = vmatprep.subr.mxu0 0.0
        %1621 = vmatpush2.msra.mxu0 0.0
        %1622 = vmatprep.subr.mxu0 0.0
        %1623 = vmatpush2.msra.mxu0 0.0
        %1624 = vmatprep.subr.mxu0 0.0
        %1625 = vmatpush2.msra.mxu0 0.0
        %1626 = vmatprep.subr.mxu0 0.0
        %1627 = vmatpush2.msra.mxu0 0.0
        %1628 = vmatprep.subr.mxu0 0.0
        %1629 = vmatpush2.msra.mxu0 0.0
        %1630 = vmatprep.subr.mxu0 0.0
        %1631 = vmatpush2.msra.mxu0 0.0
        %1632 = vmatprep.subr.mxu0 0.0
        %1633 = vmatpush2.msra.mxu0 0.0
        %1634 = vmatprep.subr.mxu0 0.0
        %1635 = vmatpush2.msra.mxu0 0.0
        %1636 = vmatprep.subr.mxu0 0.0
        %1637 = vmatpush2.msra.mxu0 0.0
        %1638 = vmatprep.subr.mxu0 0.0
        %1639 = vmatpush2.msra.mxu0 0.0
        %1640 = vmatprep.subr.mxu0 0.0
        %1641 = vmatpush2.msra.mxu0 0.0
        %1642 = vmatprep.mubr.f32.mxu0 0.0
        %1643 = vmatmul.mubr.f32.gmra.mxu0 %v1549
        %v1644 = vpop.f32.mrf.mxu0
        %v1645 = vadd.f32 0.0, %v1644
        %v1646 = vpop.f32.mrf.mxu0
        %1647 = vmatprep.mubr.f32.mxu0 0.0
        %1648 = vmatmul.mubr.f32.gmra.mxu0 %v1552
        %v1649 = vpop.f32.mrf.mxu0
        %v1650 = vadd.f32 0.0, %v1649
        %v1651 = vpop.f32.mrf.mxu0
        %1652 = vmatprep.mubr.f32.mxu0 0.0
        %1653 = vmatmul.mubr.f32.gmra.mxu0 %v1555
        %v1654 = vpop.f32.mrf.mxu0
        %v1655 = vadd.f32 0.0, %v1654
        %v1656 = vpop.f32.mrf.mxu0
        %1657 = vmatprep.mubr.f32.mxu0 0.0
        %1658 = vmatmul.mubr.f32.gmra.mxu0 %v1558
        %v1659 = vpop.f32.mrf.mxu0
        %v1660 = vadd.f32 0.0, %v1659
        %v1661 = vpop.f32.mrf.mxu0
        %1662 = vmatprep.mubr.f32.mxu0 0.0
        %1663 = vmatmul.mubr.f32.gmra.mxu0 %v1561
        %v1664 = vpop.f32.mrf.mxu0
        %v1665 = vadd.f32 0.0, %v1664
        %v1666 = vpop.f32.mrf.mxu0
        %1667 = vmatprep.mubr.f32.mxu0 0.0
        %1668 = vmatmul.mubr.f32.gmra.mxu0 %v1564
        %v1669 = vpop.f32.mrf.mxu0
        %v1670 = vadd.f32 0.0, %v1669
        %v1671 = vpop.f32.mrf.mxu0
        %1672 = vmatprep.mubr.f32.mxu0 0.0
        %1673 = vmatmul.mubr.f32.gmra.mxu0 %v1567
        %v1674 = vpop.f32.mrf.mxu0
        %v1675 = vadd.f32 0.0, %v1674
        %v1676 = vpop.f32.mrf.mxu0
        %1677 = vmatprep.mubr.f32.mxu0 0.0
        %1678 = vmatmul.mubr.f32.gmra.mxu0 %v1570
        %v1679 = vpop.f32.mrf.mxu0
        %v1680 = vadd.f32 0.0, %v1679
        %v1681 = vpop.f32.mrf.mxu0
        %1682 = vmatprep.mubr.f32.mxu0 0.0
        %1683 = vmatmul.mubr.f32.gmra.mxu0 %v1573
        %v1684 = vpop.f32.mrf.mxu0
        %v1685 = vadd.f32 0.0, %v1684
        %v1686 = vpop.f32.mrf.mxu0
        %1687 = vdwg.mxu0
        %v1688 = vadd.f32 %v1526, %v1645
        %v1689 = vadd.f32 %v1527, %v1650
        %v1690 = vadd.f32 %v1528, %v1655
        %v1691 = vadd.f32 %v1529, %v1660
        %v1692 = vadd.f32 %v1530, %v1665
        %v1693 = vadd.f32 %v1531, %v1670
        %v1694 = vadd.f32 %v1532, %v1675
        %v1695 = vadd.f32 %v1533, %v1680
        %v1696 = vadd.f32 %v1534, %v1685
        %v1697 = vld [vmem:[%s2] sm:$0x1]
        %v1699 = vlaneseq
        %v1700 = vshrl.u32 %v1699, 7
        %v1701 = vsub.s32 0, %v1700
        %v1702 = vrot.slane %v1697, %v1701
        %v1704 = vadd.f32 %v1688, %v1702
        %v1705 = vadd.f32 %v1689, %v1702
        %v1706 = vadd.f32 %v1690, %v1702
        %v1707 = vadd.f32 %v1691, %v1702
        %v1708 = vadd.f32 %v1692, %v1702
        %v1709 = vadd.f32 %v1693, %v1702
        %v1710 = vadd.f32 %v1694, %v1702
        %v1711 = vadd.f32 %v1695, %v1702
        %v1712 = vadd.f32 %v1696, %v1702
        %v1713 = vld [vmem:[%s3] sm:$0xff]
        %v1714 = vld [vmem:[%s3 + $0x8] sm:$0xff]
        %v1715 = vld [vmem:[%s3 + $0x10] sm:$0xff]
        %v1716 = vld [vmem:[%s3 + $0x18] sm:$0xff]
        %v1717 = vld [vmem:[%s3 + $0x20] sm:$0xff]
        %v1718 = vld [vmem:[%s3 + $0x28] sm:$0xff]
        %v1719 = vld [vmem:[%s3 + $0x30] sm:$0xff]
        %v1720 = vld [vmem:[%s3 + $0x38] sm:$0xff]
        %v1721 = vld [vmem:[%s3 + $0x40] sm:$0xff]
        %1723 = vset.pattern.permute.xlu0 0
        %1724 = vperm.xlu0 %1723, %v1713
        %v1725 = vpop.permute.xlu0 %1724
        %1728 = vset.pattern.permute.xlu0 0
        %1729 = vperm.xlu0 %1728, %v1714
        %v1730 = vpop.permute.xlu0 %1729
        %1733 = vset.pattern.permute.xlu0 0
        %1734 = vperm.xlu0 %1733, %v1715
        %v1735 = vpop.permute.xlu0 %1734
        %1738 = vset.pattern.permute.xlu0 0
        %1739 = vperm.xlu0 %1738, %v1716
        %v1740 = vpop.permute.xlu0 %1739
        %1743 = vset.pattern.permute.xlu0 0
        %1744 = vperm.xlu0 %1743, %v1717
        %v1745 = vpop.permute.xlu0 %1744
        %1748 = vset.pattern.permute.xlu0 0
        %1749 = vperm.xlu0 %1748, %v1718
        %v1750 = vpop.permute.xlu0 %1749
        %1753 = vset.pattern.permute.xlu0 0
        %1754 = vperm.xlu0 %1753, %v1719
        %v1755 = vpop.permute.xlu0 %1754
        %1758 = vset.pattern.permute.xlu0 0
        %1759 = vperm.xlu0 %1758, %v1720
        %v1760 = vpop.permute.xlu0 %1759
        %1763 = vset.pattern.permute.xlu0 0
        %1764 = vperm.xlu0 %1763, %v1721
        %v1765 = vpop.permute.xlu0 %1764
        %v1767 = vmul.f32 %v1704, %v1725
        %v1768 = vmul.f32 %v1705, %v1730
        %v1769 = vmul.f32 %v1706, %v1735
        %v1770 = vmul.f32 %v1707, %v1740
        %v1771 = vmul.f32 %v1708, %v1745
        %v1772 = vmul.f32 %v1709, %v1750
        %v1773 = vmul.f32 %v1710, %v1755
        %v1774 = vmul.f32 %v1711, %v1760
        %v1775 = vmul.f32 %v1712, %v1765
        %vm1776 = vcmask 64512
        %v1777 = vsel %vm1776, %v1767, 0.0
        %v1778 = vsel %vm1776, %v1768, 0.0
        %v1779 = vadd.f32 %v1777, %v1778
        %v1780 = vsel %vm1776, %v1769, 0.0
        %v1781 = vadd.f32 %v1779, %v1780
        %v1782 = vsel %vm1776, %v1770, 0.0
        %v1783 = vadd.f32 %v1781, %v1782
        %v1784 = vsel %vm1776, %v1771, 0.0
        %v1785 = vadd.f32 %v1783, %v1784
        %v1786 = vsel %vm1776, %v1772, 0.0
        %v1787 = vadd.f32 %v1785, %v1786
        %v1788 = vsel %vm1776, %v1773, 0.0
        %v1789 = vadd.f32 %v1787, %v1788
        %v1790 = vsel %vm1776, %v1774, 0.0
        %v1791 = vadd.f32 %v1789, %v1790
        %v1792 = vsel %vm1776, %v1775, 0.0
        %v1793 = vadd.f32 %v1791, %v1792
        %v1794 = vrot.slane %v1793, 4
        %v1795 = vadd.f32 %v1793, %v1794
        %v1796 = vrot.slane %v1795, 2
        %v1797 = vadd.f32 %v1795, %v1796
        %v1798 = vrot.slane %v1797, 1
        %v1799 = vadd.f32 %v1797, %v1798
        %v1800 = vmul.f32 %v1799, 0.015625
        %v1801 = vsub.f32 %v1704, %v1800
        %v1802 = vsub.f32 %v1705, %v1800
        %v1803 = vsub.f32 %v1706, %v1800
        %v1804 = vsub.f32 %v1707, %v1800
        %v1805 = vsub.f32 %v1708, %v1800
        %v1806 = vsub.f32 %v1709, %v1800
        %v1807 = vsub.f32 %v1710, %v1800
        %v1808 = vsub.f32 %v1711, %v1800
        %v1809 = vsub.f32 %v1712, %v1800
        %v1810 = vmul.f32 %v1801, %v1725
        %v1811 = vmul.f32 %v1802, %v1730
        %v1812 = vmul.f32 %v1803, %v1735
        %v1813 = vmul.f32 %v1804, %v1740
        %v1814 = vmul.f32 %v1805, %v1745
        %v1815 = vmul.f32 %v1806, %v1750
        %v1816 = vmul.f32 %v1807, %v1755
        %v1817 = vmul.f32 %v1808, %v1760
        %v1818 = vmul.f32 %v1809, %v1765
        %vm1819 = vcmask 57344
        %1820 = vst.msk [vmem:[%s240] sm:$0x1] %vm1819, %v1799
        %v1821 = vmul.f32 %v1810, %v1810
        %v1822 = vmul.f32 %v1811, %v1811
        %v1823 = vmul.f32 %v1812, %v1812
        %v1824 = vmul.f32 %v1813, %v1813
        %v1825 = vmul.f32 %v1814, %v1814
        %v1826 = vmul.f32 %v1815, %v1815
        %v1827 = vmul.f32 %v1816, %v1816
        %v1828 = vmul.f32 %v1817, %v1817
        %v1829 = vmul.f32 %v1818, %v1818
        %v1830 = vsel %vm1776, %v1821, 0.0
        %v1831 = vsel %vm1776, %v1822, 0.0
        %v1832 = vadd.f32 %v1830, %v1831
        %v1833 = vsel %vm1776, %v1823, 0.0
        %v1834 = vadd.f32 %v1832, %v1833
        %v1835 = vsel %vm1776, %v1824, 0.0
        %v1836 = vadd.f32 %v1834, %v1835
        %v1837 = vsel %vm1776, %v1825, 0.0
        %v1838 = vadd.f32 %v1836, %v1837
        %v1839 = vsel %vm1776, %v1826, 0.0
        %v1840 = vadd.f32 %v1838, %v1839
        %v1841 = vsel %vm1776, %v1827, 0.0
        %v1842 = vadd.f32 %v1840, %v1841
        %v1843 = vsel %vm1776, %v1828, 0.0
        %v1844 = vadd.f32 %v1842, %v1843
        %v1845 = vsel %vm1776, %v1829, 0.0
        %v1846 = vadd.f32 %v1844, %v1845
        %v1847 = vrot.slane %v1846, 4
        %v1848 = vadd.f32 %v1846, %v1847
        %v1849 = vrot.slane %v1848, 2
        %v1850 = vadd.f32 %v1848, %v1849
        %v1851 = vrot.slane %v1850, 1
        %v1852 = vadd.f32 %v1850, %v1851
        %1853 = vst.msk [vmem:[%s246] sm:$0x1] %vm1819, %v1852
        %s1854 = sand.u32 %s136, 1
        %s1855 = scalar_lea.sflag [#allocation3], %s1854
        %s1856 = sand.u32 %s136, 1
        %s1857 = scalar_lea.vmem [#allocation2], %s1856
        %s1858 = sand.u32 %s166, 1
        %s1859 = scalar_lea.sflag [#allocation5], %s1858
        %s1860 = sand.u32 %s166, 1
        %s1861 = scalar_lea.vmem [#allocation4], %s1860
        // Predicated region
        $region37: #{tpu_custom_call.1} parent=35 // pred_check
          %p1862 = pneg %p146
        $region38: #{tpu_custom_call.1} parent=35 // pred_check_branch
          %1864 = sbr.rel (%p1862) target = $region40
        $region39: #{tpu_custom_call.1} parent=35 // pred_region
          %s1865 = smul.u32 %s27, 4
          %s1866 = sadd.s32 %s1865, %s28
          %s1868 = ssub.s32 16, 16
          %1869 = vsyncadd %s1855, %s1868
          %s1870 = smul.addr %s1866, 16
          %s1871 = scalar_lea.hbm %s4, %s1870
          %s1873 = sshll.u32 %s1857, 4
          %s1874 = int_to_ptr.vmem [resolvable:$true] %s1873
          %1876 = dma.vmem_to_hbm [thread:$0]  %s1874, 16, %s1871, %s1855
        $region40: #{tpu_custom_call.1} parent=35 // pred_fallthru
          _
        // Predicated region
        $region41: #{tpu_custom_call.1} parent=35 // pred_check
          %p1877 = pneg %p176
        $region42: #{tpu_custom_call.1} parent=35 // pred_check_branch
          %1879 = sbr.rel (%p1877) target = $region44
        $region43: #{tpu_custom_call.1} parent=35 // pred_region
          %s1880 = smul.u32 %s27, 4
          %s1881 = sadd.s32 %s1880, %s28
          %s1883 = ssub.s32 16, 16
          %1884 = vsyncadd %s1859, %s1883
          %s1885 = smul.addr %s1881, 16
          %s1886 = scalar_lea.hbm %s5, %s1885
          %s1888 = sshll.u32 %s1861, 4
          %s1889 = int_to_ptr.vmem [resolvable:$true] %s1888
          %1891 = dma.vmem_to_hbm [thread:$0]  %s1889, 16, %s1886, %s1859
        $region44: #{tpu_custom_call.1} parent=35 // pred_fallthru
          _
      $region36: #{tpu_custom_call.1} parent=5 // pred_fallthru
        _
      %p1892 = scmp.le.s32.totalorder 2, %s18
      // Predicated region
      $region45: #{tpu_custom_call.1} parent=5 // pred_check
        %p1893 = pneg %p1892
      $region46: #{tpu_custom_call.1} parent=5 // pred_check_branch
        %1895 = sbr.rel (%p1893) target = $region48
      $region47: #{tpu_custom_call.1} parent=5 // pred_region
        %s1896 = ssub.s32 %s18, 2
        // Predicated region
        $region49: #{tpu_custom_call.1} parent=47 // pred_check
          %p1897 = pneg %p152
        $region50: #{tpu_custom_call.1} parent=47 // pred_check_branch
          %1899 = sbr.rel (%p1897) target = $region52
        $region51: #{tpu_custom_call.1} parent=47 // pred_region
          %s1900 = sand.u32 %s137, 1
          %s1901 = scalar_lea.sflag [#allocation3], %s1900
          %s1902 = sand.u32 %s137, 1
          %s1903 = scalar_lea.vmem [#allocation2], %s1902
          %1904 = dma.done %s1901, 16
        $region52: #{tpu_custom_call.1} parent=47 // pred_fallthru
          _
        // Predicated region
        $region53: #{tpu_custom_call.1} parent=47 // pred_check
          %p1905 = pneg %p182
        $region54: #{tpu_custom_call.1} parent=47 // pred_check_branch
          %1907 = sbr.rel (%p1905) target = $region56
        $region55: #{tpu_custom_call.1} parent=47 // pred_region
          %s1908 = sand.u32 %s167, 1
          %s1909 = scalar_lea.sflag [#allocation5], %s1908
          %s1910 = sand.u32 %s167, 1
          %s1911 = scalar_lea.vmem [#allocation4], %s1910
          %1912 = dma.done %s1909, 16
        $region56: #{tpu_custom_call.1} parent=47 // pred_fallthru
          _
      $region48: #{tpu_custom_call.1} parent=5 // pred_fallthru
        _
    $region6: #{tpu_custom_call.1} parent=1 // loop_footer
      %s22 = sadd.s32 1, %s18
    $region7: #{tpu_custom_call.1} parent=1 // loop_footer_branch
      %17 = sbr.rel target = $region3
    $region8: #{tpu_custom_call.1} parent=1 // loop_exit
      _
    %1913 = vsyncpa [#allocation3], 1
    %s1914 = scalar_lea.sflag [#allocation3], 1
    %1915 = vsyncpa %s1914, 1
    %1916 = vsyncpa [#allocation5], 1
    %s1917 = scalar_lea.sflag [#allocation5], 1
    %1918 = vsyncpa %s1917, 1

</llo_original>
